<compile_context>
chip_gen: v6e
topology: v6e:2x2x1
jax: 0.10.0
libtpu: 0.0.40
codegen_flags: <defaults>
</compile_context>

<pallas_src>
import functools

import jax
import jax.numpy as jnp
import numpy as np
from jax import lax
from jax.experimental import pallas as pl
from jax.experimental.pallas import tpu as pltpu

_MiB = 1024 * 1024


# --------------------------------------------------------------------------
# Hardware-aware defaults
# --------------------------------------------------------------------------
def _default_config():
    """Returns (tm, th_desired, vmem_ceiling_bytes) for the local TPU gen."""
    vmem_cap = 128 * _MiB
    try:
        info = pltpu.get_tpu_info()
        vmem_cap = int(getattr(info, "vmem_capacity_bytes", vmem_cap))
    except Exception:
        pass
    if vmem_cap <= 64 * _MiB:
        # v7x-class: 64 MiB VMEM per TensorCore, 3.2 TB/s HBM.
        return 256, 256, 56 * _MiB
    # v5e / v6e: 128 MiB VMEM -> largest tiles (v6e roofline ~650 flop/B).
    return 512, 512, 110 * _MiB


def _pick_chunk(total, desired, quantum=128):
    """Largest multiple of `quantum` <= desired that divides `total`."""
    desired = min(desired, total)
    t = (desired // quantum) * quantum
    while t >= quantum:
        if total % t == 0:
            return t
        t -= quantum
    return total


# --------------------------------------------------------------------------
# One-time weight preparation (call at parameter-setup time, NOT per forward)
# --------------------------------------------------------------------------
def prepare_moe_weights(w1, w2, w3, *, th=None):
    """Cast expert weights to bf16 once and fuse w1/w3 into one interleaved
    (E, 2*hidden, d_model) operand whose hidden chunks alternate
    [w1 chunk h ; w3 chunk h], so the kernel DMAs a single (2*th, d_model)
    block per step.  Returns (w13_bf16, w2_bf16, th)."""
    E, H, D = w1.shape
    if th is None:
        _, th_desired, _ = _default_config()
        th = _pick_chunk(H, th_desired)
    else:
        th = _pick_chunk(H, th)
    nh = H // th
    w1b = w1.astype(jnp.bfloat16).reshape(E, nh, th, D)
    w3b = w3.astype(jnp.bfloat16).reshape(E, nh, th, D)
    w13 = jnp.concatenate([w1b, w3b], axis=2).reshape(E, 2 * H, D)
    return w13, w2.astype(jnp.bfloat16), th


# --------------------------------------------------------------------------
# Kernel
# --------------------------------------------------------------------------
def _moe_mlp_kernel(tiles_ref, grps_ref, lo_ref, hi_ref, fv_ref,
                    x_ref, w13_ref, w2_ref, o_ref):
    # x_ref:   (tm, d_model)        bf16   (resident across h / revisits)
    # w13_ref: (2*th, d_model)      bf16   (w1 chunk ; w3 chunk of this expert)
    # w2_ref:  (th, d_model)        bf16
    # o_ref:   (tm, d_model)        f32    (resident accumulator)
    g = pl.program_id(0)
    h = pl.program_id(1)

    @pl.when(jnp.logical_and(h == 0, fv_ref[g] == 1))
    def _zero():
        o_ref[...] = jnp.zeros_like(o_ref)

    lo = lo_ref[g]
    hi = hi_ref[g]

    @pl.when(hi > lo)   # skip phantom visits entirely
    def _compute():
        x = x_ref[...]
        w13 = w13_ref[...]
        w2 = w2_ref[...]
        th = w2.shape[0]

        # NT gemm: contract last dims of both operands (no materialized w.T).
        nt = (((1,), (1,)), ((), ()))
        x12 = lax.dot_general(x, w13, nt,
                              preferred_element_type=jnp.float32)  # (tm, 2*th)
        x1 = x12[:, :th]
        x2 = x12[:, th:]
        hh = (x1 * jax.nn.sigmoid(x1)) * x2                        # SwiGLU f32

        # Mask rows outside this visit's expert range (and padding rows).
        rows = lax.broadcasted_iota(jnp.int32, (hh.shape[0], 1), 0)
        hh = jnp.where(jnp.logical_and(rows >= lo, rows < hi), hh, 0.0)

        # Down-projection chunk, accumulated in f32 directly into the output.
        o_ref[...] += jnp.dot(hh.astype(w2.dtype), w2,
                              preferred_element_type=jnp.float32)


# --------------------------------------------------------------------------
# Forward implementation
# --------------------------------------------------------------------------
@functools.partial(jax.jit, static_argnames=("tm", "th", "vmem_limit_bytes"))
def _dropless_moe_mlp_impl(x, w13, w2, batch_sizes, *, tm, th, vmem_limit_bytes):
    T, D = x.shape
    E, H, _ = w2.shape
    num_h = H // th
    T_pad = ((T + tm - 1) // tm) * tm
    num_row_tiles = T_pad // tm
    # Upper bound on (row-tile, expert) visits: each expert boundary that falls
    # strictly inside a tile adds one extra visit.
    G_max = num_row_tiles + E - 1

    x_lo = x.astype(jnp.bfloat16)
    if T_pad != T:
        x_lo = jnp.pad(x_lo, ((0, T_pad - T), (0, 0)))

    # ---- visit schedule (all on device; no host sync) --------------------
    sizes = batch_sizes.astype(jnp.int32)
    group_end = jnp.cumsum(sizes)
    group_start = group_end - sizes
    nonempty = sizes > 0
    first_tile = group_start // tm
    last_tile = jnp.where(nonempty, (group_end - 1) // tm, first_tile)
    visits_g = jnp.where(nonempty, last_tile - first_tile + 1, 0)
    visits_cum = jnp.cumsum(visits_g)

    v_idx = jnp.arange(G_max, dtype=jnp.int32)
    grp = jnp.searchsorted(visits_cum, v_idx, side="right").astype(jnp.int32)
    valid = grp < E
    grp_c = jnp.minimum(grp, E - 1)
    voff_excl = visits_cum[grp_c] - visits_g[grp_c]
    tile_raw = jnp.clip(first_tile[grp_c] + (v_idx - voff_excl),
                        0, num_row_tiles - 1)
    lo_raw = jnp.clip(group_start[grp_c] - tile_raw * tm, 0, tm)
    hi_raw = jnp.clip(group_end[grp_c] - tile_raw * tm, 0, tm)

    # Phantom (beyond the real visit count) steps alias the last real visit's
    # blocks (no extra DMA) with an empty row range (no compute, no writes).
    last_v = jnp.clip(visits_cum[-1] - 1, 0, G_max - 1)
    visit_tile = jnp.where(valid, tile_raw, tile_raw[last_v]).astype(jnp.int32)
    visit_grp = jnp.where(valid, grp_c, grp_c[last_v]).astype(jnp.int32)
    row_lo = jnp.where(valid, lo_raw, 0).astype(jnp.int32)
    row_hi = jnp.where(valid, hi_raw, 0).astype(jnp.int32)
    prev_tile = jnp.concatenate([jnp.full((1,), -1, jnp.int32), visit_tile[:-1]])
    first_visit = (visit_tile != prev_tile).astype(jnp.int32)

    # ---- grid spec --------------------------------------------------------
    grid_spec = pltpu.PrefetchScalarGridSpec(
        num_scalar_prefetch=5,
        # hidden-chunk (reduction) axis innermost so the (tm, d_model) output
        # block stays resident across it (and across revisits of a tile).
        grid=(G_max, num_h),
        in_specs=[
            pl.BlockSpec((tm, D),
                         lambda g, h, tiles, grps, lo, hi, fv: (tiles[g], 0)),
            pl.BlockSpec((None, 2 * th, D),
                         lambda g, h, tiles, grps, lo, hi, fv: (grps[g], h, 0)),
            pl.BlockSpec((None, th, D),
                         lambda g, h, tiles, grps, lo, hi, fv: (grps[g], h, 0)),
        ],
        out_specs=pl.BlockSpec((tm, D),
                               lambda g, h, tiles, grps, lo, hi, fv: (tiles[g], 0)),
    )

    cost = pl.CostEstimate(
        flops=6 * T * H * D,
        transcendentals=T * H,
        bytes_accessed=(G_max * 3 * H * D * 2   # weights re-streamed per visit
                        + T_pad * D * 2         # x (bf16)
                        + T_pad * D * 4),       # out (f32)
    )

    out = pl.pallas_call(
        _moe_mlp_kernel,
        # TODO(synk): optional bf16 output variant to halve writeback traffic.
        out_shape=jax.ShapeDtypeStruct((T_pad, D), jnp.float32),
        grid_spec=grid_spec,
        compiler_params=pltpu.CompilerParams(
            # Axis 0 revisits output tiles at expert boundaries, so it must be
            # "arbitrary".  TODO(synk): shard row tiles across v7x's two
            # TensorCores (CORE_PARALLEL / core_map) for boundary-free tiles.
            dimension_semantics=("arbitrary", "arbitrary"),
            vmem_limit_bytes=vmem_limit_bytes,
        ),
        cost_estimate=cost,
    )(visit_tile, visit_grp, row_lo, row_hi, first_visit, x_lo, w13, w2)

    return out[:T]


def dropless_moe_mlp(x, w13, w2, batch_size_per_expert, *, th, tm=None,
                     vmem_limit_bytes=None, validate=False):
    """DroplessMoEMLP.forward.  `w13`/`w2` come from `prepare_moe_weights`
    (bf16, w1/w3 fused); `batch_size_per_expert` may be arbitrary non-negative
    per-expert token counts summing to x.shape[0] (tokens grouped by expert)."""
    T, D = x.shape
    E, H, D2 = w2.shape
    if D2 != D or w13.shape != (E, 2 * H, D):
        raise ValueError("weight shapes do not match x / each other")
    if H % th != 0:
        raise ValueError("th must divide hidden_size (use prepare_moe_weights)")

    auto_tm, _, vmem_ceiling = _default_config()
    if tm is None:
        tm = auto_tm
    tm = max(8, (min(tm, ((T + 7) // 8) * 8) // 8) * 8)

    if vmem_limit_bytes is None:
        block_bytes = 2 * (tm * D * 2 + 2 * th * D * 2 + th * D * 2 + tm * D * 4)
        vmem_limit_bytes = int(min(vmem_ceiling, max(32 * _MiB, 2 * block_bytes)))

    if validate:
        # Debug-only: forces a device->host sync; never enable on the hot path.
        sizes_host = np.asarray(jax.device_get(batch_size_per_expert))
        if sizes_host.ndim != 1 or sizes_host.shape[0] != E:
            raise ValueError("batch_size_per_expert must be 1-D with E entries")
        if np.any(sizes_host < 0) or int(sizes_host.sum()) != T:
            raise ValueError("batch_size_per_expert must be >=0 and sum to T")

    return _dropless_moe_mlp_impl(
        x, w13, w2, jnp.asarray(batch_size_per_expert, dtype=jnp.int32),
        tm=tm, th=th, vmem_limit_bytes=vmem_limit_bytes)


# --------------------------------------------------------------------------
# Reference + demo
# --------------------------------------------------------------------------
def _reference(x, w1, w2, w3, batch_size_per_expert):
    """Pure-JAX reference mirroring the grouped_gemm fast path."""
    sizes = np.asarray(jax.device_get(batch_size_per_expert))
    xb = x.astype(jnp.bfloat16)
    w1b, w2b, w3b = (w.astype(jnp.bfloat16) for w in (w1, w2, w3))
    outs, start = [], 0
    for e, size in enumerate(sizes):
        xe = xb[start:start + int(size), :]
        x1 = jnp.dot(xe, w1b[e].T, preferred_element_type=jnp.float32)
        x2 = jnp.dot(xe, w3b[e].T, preferred_element_type=jnp.float32)
        h = jax.nn.silu(x1) * x2
        outs.append(jnp.dot(h.astype(jnp.bfloat16), w2b[e],
                            preferred_element_type=jnp.float32))
        start += int(size)
    return jnp.concatenate(outs, axis=0)


def _kaiming_uniform(key, shape, fan_in):
    # nn.init.kaiming_uniform_(w, a=sqrt(5)) -> Uniform(-1/sqrt(fan_in), 1/sqrt(fan_in))
    bound = 1.0 / np.sqrt(fan_in)
    return jax.random.uniform(key, shape, jnp.float32, minval=-bound, maxval=bound)


if __name__ == "__main__":
    d_model = 128
    hidden_size = 512
    num_experts = 4
    tm = 128
    th = 256

    # Deliberately ragged, non-tile-aligned per-expert token counts (one empty
    # expert) to exercise the masked partial-tile / revisit schedule.
    batch_size_per_expert = jnp.array([100, 7, 0, 213], dtype=jnp.int32)
    T = 320

    key = jax.random.PRNGKey(0)
    kx, k1, k2, k3 = jax.random.split(key, 4)
    x = jax.random.normal(kx, (T, d_model), dtype=jnp.float32)
    # Module stores params as (num_experts * hidden, d_model); fan_in = d_model.
    w1 = _kaiming_uniform(k1, (num_experts, hidden_size, d_model), d_model)
    w2 = _kaiming_uniform(k2, (num_experts, hidden_size, d_model), d_model)
    w3 = _kaiming_uniform(k3, (num_experts, hidden_size, d_model), d_model)

    # One-time weight prep (bf16 cast + w1/w3 fusion), outside the hot path.
    w13_b, w2_b, th = prepare_moe_weights(w1, w2, w3, th=th)

    out = dropless_moe_mlp(x, w13_b, w2_b, batch_size_per_expert, th=th, tm=tm)
    out = jax.block_until_ready(out)

    ref = _reference(x, w1, w2, w3, batch_size_per_expert)
    np.testing.assert_allclose(np.asarray(out), np.asarray(ref),
                               rtol=2e-3, atol=2e-3)

    print("KERNEL_OK")
</pallas_src>

<mosaic_0001>
module attributes {stable_mosaic.version = 11 : i64} {
  func.func @_moe_mlp_kernel(%arg0: i32, %arg1: i32, %arg2: memref<6xi32, #tpu.memory_space<smem>>, %arg3: memref<6xi32, #tpu.memory_space<smem>>, %arg4: memref<6xi32, #tpu.memory_space<smem>>, %arg5: memref<6xi32, #tpu.memory_space<smem>>, %arg6: memref<6xi32, #tpu.memory_space<smem>>, %arg7: memref<128x128xbf16, #tpu.memory_space<vmem>>, %arg8: memref<1x512x128xbf16, #tpu.memory_space<vmem>>, %arg9: memref<1x256x128xbf16, #tpu.memory_space<vmem>>, %arg10: memref<128x128xf32, #tpu.memory_space<vmem>>) attributes {dimension_semantics = [#tpu.dimension_semantics<arbitrary>, #tpu.dimension_semantics<arbitrary>], iteration_bounds = array<i64: 6, 2>, scalar_prefetch = 5 : i64, scratch_operands = 0 : i64, tpu.core_type = #tpu.core_type<tc>, window_params = [{transform_indices = @transform_0, window_bounds = array<i64: 128, 128>}, {transform_indices = @transform_1, window_bounds = array<i64: 1, 512, 128>}, {transform_indices = @transform_2, window_bounds = array<i64: 1, 256, 128>}, {transform_indices = @transform_3, window_bounds = array<i64: 128, 128>}]} {
    %c0_i32 = arith.constant 0 : i32
    %0 = arith.cmpi eq, %arg1, %c0_i32 : i32
    %1 = arith.index_cast %arg0 : i32 to index
    %2 = memref.load %arg6[%1] : memref<6xi32, #tpu.memory_space<smem>>
    %c1_i32 = arith.constant 1 : i32
    %3 = arith.cmpi eq, %2, %c1_i32 : i32
    %4 = arith.andi %0, %3 : i1
    %5 = arith.extui %4 : i1 to i32
    %c0_i32_0 = arith.constant 0 : i32
    %6 = arith.cmpi ne, %5, %c0_i32_0 : i32
    scf.if %6 {
      %cst = arith.constant 0.000000e+00 : f32
      %14 = vector.broadcast %cst : f32 to vector<128x128xf32>
      %c0 = arith.constant 0 : index
      %c0_2 = arith.constant 0 : index
      %15 = vector.load %arg10[%c0, %c0_2] : memref<128x128xf32, #tpu.memory_space<vmem>>, vector<128x128xf32>
      tpu.vector_store %arg10[%c0, %c0_2], %14 {strides = array<i32>} : memref<128x128xf32, #tpu.memory_space<vmem>>, vector<128x128xf32>,
    } else {
    }
    %7 = arith.index_cast %arg0 : i32 to index
    %8 = memref.load %arg4[%7] : memref<6xi32, #tpu.memory_space<smem>>
    %9 = arith.index_cast %arg0 : i32 to index
    %10 = memref.load %arg5[%9] : memref<6xi32, #tpu.memory_space<smem>>
    %11 = arith.cmpi sgt, %10, %8 : i32
    %12 = arith.extui %11 : i1 to i32
    %c0_i32_1 = arith.constant 0 : i32
    %13 = arith.cmpi ne, %12, %c0_i32_1 : i32
    scf.if %13 {
      %c0 = arith.constant 0 : index
      %c0_2 = arith.constant 0 : index
      %14 = vector.load %arg7[%c0, %c0_2] : memref<128x128xbf16, #tpu.memory_space<vmem>>, vector<128x128xbf16>
      %c0_3 = arith.constant 0 : index
      %c0_4 = arith.constant 0 : index
      %c0_5 = arith.constant 0 : index
      %15 = vector.load %arg8[%c0_3, %c0_4, %c0_5] : memref<1x512x128xbf16, #tpu.memory_space<vmem>>, vector<1x512x128xbf16>
      %16 = vector.shape_cast %15 : vector<1x512x128xbf16> to vector<512x128xbf16>
      %c0_6 = arith.constant 0 : index
      %c0_7 = arith.constant 0 : index
      %c0_8 = arith.constant 0 : index
      %17 = vector.load %arg9[%c0_6, %c0_7, %c0_8] : memref<1x256x128xbf16, #tpu.memory_space<vmem>>, vector<1x256x128xbf16>
      %18 = vector.shape_cast %17 : vector<1x256x128xbf16> to vector<256x128xbf16>
      %cst = arith.constant dense<0.000000e+00> : vector<128x512xf32>
      %19 = tpu.matmul %14, %16, %cst {dimension_numbers = #tpu.dot_dimension_numbers<[1], [1], [0], [0], [0, 0, 1, 0], [], []>} : vector<128x128xbf16>, vector<512x128xbf16>, vector<128x512xf32> -> vector<128x512xf32>
      %20 = vector.extract_strided_slice %19 {offsets = [0, 0], sizes = [128, 256], strides = [1, 1]} : vector<128x512xf32> to vector<128x256xf32>
      %21 = vector.extract_strided_slice %19 {offsets = [0, 256], sizes = [128, 256], strides = [1, 1]} : vector<128x512xf32> to vector<128x256xf32>
      %22 = arith.negf %20 : vector<128x256xf32>
      %23 = math.exp %22 : vector<128x256xf32>
      %cst_9 = arith.constant 1.000000e+00 : f32
      %24 = vector.broadcast %cst_9 : f32 to vector<128x256xf32>
      %25 = arith.addf %24, %23 : vector<128x256xf32>
      %26 = arith.divf %24, %25 : vector<128x256xf32>
      %27 = arith.mulf %20, %26 : vector<128x256xf32>
      %28 = arith.mulf %27, %21 : vector<128x256xf32>
      %29 = tpu.iota {dimensions = array<i32: 0>} : vector<128x1xi32>
      %30 = vector.broadcast %8 : i32 to vector<128x1xi32>
      %31 = arith.cmpi sge, %29, %30 : vector<128x1xi32>
      %32 = vector.broadcast %10 : i32 to vector<128x1xi32>
      %33 = arith.cmpi slt, %29, %32 : vector<128x1xi32>
      %34 = arith.andi %31, %33 : vector<128x1xi1>
      %cst_10 = arith.constant 0.000000e+00 : f32
      %35 = vector.shape_cast %34 : vector<128x1xi1> to vector<128x1xi1>
      %36 = vector.broadcast %35 : vector<128x1xi1> to vector<128x256xi1>
      %37 = vector.broadcast %cst_10 : f32 to vector<128x256xf32>
      %38 = arith.select %36, %28, %37 : vector<128x256xi1>, vector<128x256xf32>
      %c0_11 = arith.constant 0 : index
      %c0_12 = arith.constant 0 : index
      %39 = vector.load %arg10[%c0_11, %c0_12] : memref<128x128xf32, #tpu.memory_space<vmem>>, vector<128x128xf32>
      %40 = arith.truncf %38 : vector<128x256xf32> to vector<128x256xbf16>
      %cst_13 = arith.constant dense<0.000000e+00> : vector<128x128xf32>
      %41 = tpu.matmul %40, %18, %cst_13 {dimension_numbers = #tpu.dot_dimension_numbers<[1], [0], [0], [1], [0, 0, 1, 1], [], []>} : vector<128x256xbf16>, vector<256x128xbf16>, vector<128x128xf32> -> vector<128x128xf32>
      %42 = arith.addf %39, %41 : vector<128x128xf32>
      %c0_14 = arith.constant 0 : index
      %c0_15 = arith.constant 0 : index
      %43 = vector.load %arg10[%c0_14, %c0_15] : memref<128x128xf32, #tpu.memory_space<vmem>>, vector<128x128xf32>
      tpu.vector_store %arg10[%c0_14, %c0_15], %42 {strides = array<i32>} : memref<128x128xf32, #tpu.memory_space<vmem>>, vector<128x128xf32>,
    } else {
    }
    return
  }
  func.func @transform_0(%arg0: i32, %arg1: i32, %arg2: memref<6xi32, #tpu.memory_space<smem>>, %arg3: memref<6xi32, #tpu.memory_space<smem>>, %arg4: memref<6xi32, #tpu.memory_space<smem>>, %arg5: memref<6xi32, #tpu.memory_space<smem>>, %arg6: memref<6xi32, #tpu.memory_space<smem>>) -> (i32, i32) {
    %0 = arith.index_cast %arg0 : i32 to index
    %1 = memref.load %arg2[%0] : memref<6xi32, #tpu.memory_space<smem>>
    %c0_i32 = arith.constant 0 : i32
    %c0_i32_0 = arith.constant 0 : i32
    return %1, %c0_i32 : i32, i32
  }
  func.func @transform_1(%arg0: i32, %arg1: i32, %arg2: memref<6xi32, #tpu.memory_space<smem>>, %arg3: memref<6xi32, #tpu.memory_space<smem>>, %arg4: memref<6xi32, #tpu.memory_space<smem>>, %arg5: memref<6xi32, #tpu.memory_space<smem>>, %arg6: memref<6xi32, #tpu.memory_space<smem>>) -> (i32, i32, i32) {
    %0 = arith.index_cast %arg0 : i32 to index
    %1 = memref.load %arg3[%0] : memref<6xi32, #tpu.memory_space<smem>>
    %c0_i32 = arith.constant 0 : i32
    %c0_i32_0 = arith.constant 0 : i32
    return %1, %arg1, %c0_i32 : i32, i32, i32
  }
  func.func @transform_2(%arg0: i32, %arg1: i32, %arg2: memref<6xi32, #tpu.memory_space<smem>>, %arg3: memref<6xi32, #tpu.memory_space<smem>>, %arg4: memref<6xi32, #tpu.memory_space<smem>>, %arg5: memref<6xi32, #tpu.memory_space<smem>>, %arg6: memref<6xi32, #tpu.memory_space<smem>>) -> (i32, i32, i32) {
    %0 = arith.index_cast %arg0 : i32 to index
    %1 = memref.load %arg3[%0] : memref<6xi32, #tpu.memory_space<smem>>
    %c0_i32 = arith.constant 0 : i32
    %c0_i32_0 = arith.constant 0 : i32
    return %1, %arg1, %c0_i32 : i32, i32, i32
  }
  func.func @transform_3(%arg0: i32, %arg1: i32, %arg2: memref<6xi32, #tpu.memory_space<smem>>, %arg3: memref<6xi32, #tpu.memory_space<smem>>, %arg4: memref<6xi32, #tpu.memory_space<smem>>, %arg5: memref<6xi32, #tpu.memory_space<smem>>, %arg6: memref<6xi32, #tpu.memory_space<smem>>) -> (i32, i32) {
    %0 = arith.index_cast %arg0 : i32 to index
    %1 = memref.load %arg2[%0] : memref<6xi32, #tpu.memory_space<smem>>
    %c0_i32 = arith.constant 0 : i32
    %c0_i32_0 = arith.constant 0 : i32
    return %1, %c0_i32 : i32, i32
  }
}

</mosaic_0001>

<llo_original>
// kernel: custom-call.1
$region0: #{custom-call.1}
  %s0 = inlined_call_operand.vmem [shape: u32[6], index: 0, kind: output, shape index: {}]

// kernel: _dropless_moe_mlp_impl.1
$region0: #{_dropless_moe_mlp_impl.1}
  #allocation0 [shape = 'u32[]', space=smem, size = 0x4, offset = 0x4, fixed_abs, tag = 'smem constant byte address 0x4 - core index']
  #allocation1 [shape = 'u32[144,128]{1,0:T(1,128)}', space=vmem, size = 0x12000, scoped, tag = 'internal scratch']
  #allocation2 [shape = 's32[1]{0}', space=sflag, size = 0x4, scoped, tag = 'scoped memory for _dropless_moe_mlp_impl.1']
  #allocation3 [shape = 'u8[512]{0}', space=smem, size = 0x200, scoped, tag = 'prefetched SMEM operand 0']
  #allocation4 [shape = 'u8[512]{0}', space=smem, size = 0x200, scoped, tag = 'prefetched SMEM operand 1']
  #allocation5 [shape = 'u8[512]{0}', space=smem, size = 0x200, scoped, tag = 'prefetched SMEM operand 2']
  #allocation6 [shape = 'u8[512]{0}', space=smem, size = 0x200, scoped, tag = 'prefetched SMEM operand 3']
  #allocation7 [shape = 'u8[512]{0}', space=smem, size = 0x200, scoped, tag = 'prefetched SMEM operand 4']
  %s0 = inlined_call_operand.vmem [shape: s32[6], index: 0, kind: input, shape index: {}]
  %s1 = inlined_call_operand.vmem [shape: s32[6], index: 1, kind: input, shape index: {}]
  %s2 = inlined_call_operand.vmem [shape: s32[6], index: 2, kind: input, shape index: {}]
  %s3 = inlined_call_operand.vmem [shape: s32[6], index: 3, kind: input, shape index: {}]
  %s4 = inlined_call_operand.vmem [shape: s32[6], index: 4, kind: input, shape index: {}]
  %s5 = inlined_call_operand.vmem [shape: bf16[384,128], index: 5, kind: input, shape index: {}]
  %s6 = inlined_call_operand.vmem [shape: bf16[4,1024,128], index: 6, kind: input, shape index: {}]
  %s7 = inlined_call_operand.vmem [shape: bf16[4,512,128], index: 7, kind: input, shape index: {}]
  %s8 = inlined_call_operand.vmem [shape: f32[384,128], index: 8, kind: output, shape index: {}]
  %s9 = sld [smem:[#allocation0]]
  $region53: #{_dropless_moe_mlp_impl.1} parent=0
    _
  %s11 = ssub.s32 1, %s9
  %s12 = scalar_select 0, %s11, %s9
  %s13 = sshll.u32 %s0, 4
  %s14 = int_to_ptr.vmem [resolvable:$true] %s13
  %16 = dma.vmem_to_smem %s14, 16, [#allocation3], [#allocation2]
  %s17 = sshll.u32 %s1, 4
  %s18 = int_to_ptr.vmem [resolvable:$true] %s17
  %20 = dma.vmem_to_smem %s18, 16, [#allocation4], [#allocation2]
  %s21 = sshll.u32 %s2, 4
  %s22 = int_to_ptr.vmem [resolvable:$true] %s21
  %24 = dma.vmem_to_smem %s22, 16, [#allocation5], [#allocation2]
  %s25 = sshll.u32 %s3, 4
  %s26 = int_to_ptr.vmem [resolvable:$true] %s25
  %28 = dma.vmem_to_smem %s26, 16, [#allocation6], [#allocation2]
  %s29 = sshll.u32 %s4, 4
  %s30 = int_to_ptr.vmem [resolvable:$true] %s29
  %32 = dma.vmem_to_smem %s30, 16, [#allocation7], [#allocation2]
  %33 = dma.done [#allocation2], 80
  %34 = sfence
  loop: start=0, step=1, limit=14
  $region2: #{_dropless_moe_mlp_impl.1} parent=0 // loop_pre_header
    _
  $region3: #{_dropless_moe_mlp_impl.1} parent=0 // loop_header
    %s36 = sphi 0, %s40
    %p37 = scmp.ge.s32.totalorder %s36, 14
    %s43 = sphi 0, %s55
    %s44 = sphi 0, %s51
    %s45 = sphi 0, %s43
    %s46 = sphi 0, %s44
    %s47 = sphi 0, %s45
    %s48 = sphi 0, %s46
    %s60 = sphi 0, %s62
    %s63 = sphi 0, %s60
    %s64 = sphi 0, %s63
    %s80 = sphi 0, %s64
    %s90 = sphi 0, %s92
    %s93 = sphi 0, %s90
    %s94 = sphi 0, %s93
    %s110 = sphi 0, %s94
    %s120 = sphi 0, %s122
    %s123 = sphi 0, %s120
    %s124 = sphi 0, %s123
    %s140 = sphi 0, %s124
    %s148 = sphi 0, %s150
    %s151 = sphi 0, %s148
    %s152 = sphi 0, %s151
    %s168 = sphi 0, %s152
  $region4: #{_dropless_moe_mlp_impl.1} parent=0 // loop_header_branch
    %39 = sbr.rel (%p37) target = $region8
  $region5: #{_dropless_moe_mlp_impl.1} parent=0 // loop_body
    %s41 = ssub.s32 %s36, 1
    %s42 = ssub.s32 %s36, 2
    %s49 = sadd.s32 1, %s44
    %p50 = scmp.ge.s32.totalorder %s49, 2
    %s51 = scalar_select %p50, 0, %s49
    %s52 = sadd.s32 1, %s43
    %s53 = scalar_select %p50, %s52, %s43
    %p54 = scmp.ge.s32.totalorder %s53, 6
    %s55 = scalar_select %p54, 0, %s53
    %s56 = sld [smem:[#allocation3 + %s43]]
    %s57 = sld [smem:[#allocation3 + %s55]]
    %s58 = ssub.s32 %s56, %s57
    %p59 = scmp.eq.s32.totalorder %s58, 0
    %s61 = sadd.s32 %s60, 1
    %s62 = scalar_select %p59, %s60, %s61
    %p65 = pneg %p59
    %p66 = scmp.eq.s32.totalorder %s36, 11
    %p67 = por %p65, %p66
    %p68 = scmp.ne.s32.totalorder %s60, %s63
    %p69 = scmp.eq.s32.totalorder %s36, 0
    %p70 = por %p68, %p69
    %p71 = scmp.ne.s32.totalorder %s60, %s63
    %p72 = scmp.eq.s32.totalorder %s41, 11
    %p73 = por %p71, %p72
    %p74 = scmp.ne.s32.totalorder %s63, %s64
    %p75 = scmp.eq.s32.totalorder %s41, 0
    %p76 = por %p74, %p75
    %p77 = scmp.ne.s32.totalorder %s63, %s64
    %p78 = scmp.eq.s32.totalorder %s42, 11
    %p79 = por %p77, %p78
    %p81 = scmp.ne.s32.totalorder %s64, %s80
    %p82 = scmp.eq.s32.totalorder %s42, 0
    %p83 = por %p81, %p82
    %s84 = sld [smem:[#allocation4 + %s43]]
    %s85 = sld [smem:[#allocation4 + %s55]]
    %s86 = ssub.s32 %s84, %s85
    %s87 = ssub.s32 %s44, %s51
    %s88 = sor.u32 %s86, %s87
    %p89 = scmp.eq.s32.totalorder %s88, 0
    %s91 = sadd.s32 %s90, 1
    %s92 = scalar_select %p89, %s90, %s91
    %p95 = pneg %p89
    %p96 = scmp.eq.s32.totalorder %s36, 11
    %p97 = por %p95, %p96
    %p98 = scmp.ne.s32.totalorder %s90, %s93
    %p99 = scmp.eq.s32.totalorder %s36, 0
    %p100 = por %p98, %p99
    %p101 = scmp.ne.s32.totalorder %s90, %s93
    %p102 = scmp.eq.s32.totalorder %s41, 11
    %p103 = por %p101, %p102
    %p104 = scmp.ne.s32.totalorder %s93, %s94
    %p105 = scmp.eq.s32.totalorder %s41, 0
    %p106 = por %p104, %p105
    %p107 = scmp.ne.s32.totalorder %s93, %s94
    %p108 = scmp.eq.s32.totalorder %s42, 11
    %p109 = por %p107, %p108
    %p111 = scmp.ne.s32.totalorder %s94, %s110
    %p112 = scmp.eq.s32.totalorder %s42, 0
    %p113 = por %p111, %p112
    %s114 = sld [smem:[#allocation4 + %s43]]
    %s115 = sld [smem:[#allocation4 + %s55]]
    %s116 = ssub.s32 %s114, %s115
    %s117 = ssub.s32 %s44, %s51
    %s118 = sor.u32 %s116, %s117
    %p119 = scmp.eq.s32.totalorder %s118, 0
    %s121 = sadd.s32 %s120, 1
    %s122 = scalar_select %p119, %s120, %s121
    %p125 = pneg %p119
    %p126 = scmp.eq.s32.totalorder %s36, 11
    %p127 = por %p125, %p126
    %p128 = scmp.ne.s32.totalorder %s120, %s123
    %p129 = scmp.eq.s32.totalorder %s36, 0
    %p130 = por %p128, %p129
    %p131 = scmp.ne.s32.totalorder %s120, %s123
    %p132 = scmp.eq.s32.totalorder %s41, 11
    %p133 = por %p131, %p132
    %p134 = scmp.ne.s32.totalorder %s123, %s124
    %p135 = scmp.eq.s32.totalorder %s41, 0
    %p136 = por %p134, %p135
    %p137 = scmp.ne.s32.totalorder %s123, %s124
    %p138 = scmp.eq.s32.totalorder %s42, 11
    %p139 = por %p137, %p138
    %p141 = scmp.ne.s32.totalorder %s124, %s140
    %p142 = scmp.eq.s32.totalorder %s42, 0
    %p143 = por %p141, %p142
    %s144 = sld [smem:[#allocation3 + %s43]]
    %s145 = sld [smem:[#allocation3 + %s55]]
    %s146 = ssub.s32 %s144, %s145
    %p147 = scmp.eq.s32.totalorder %s146, 0
    %s149 = sadd.s32 %s148, 1
    %s150 = scalar_select %p147, %s148, %s149
    %p153 = pneg %p147
    %p154 = scmp.eq.s32.totalorder %s36, 11
    %p155 = por %p153, %p154
    %p156 = scmp.ne.s32.totalorder %s148, %s151
    %p157 = scmp.eq.s32.totalorder %s36, 0
    %p158 = por %p156, %p157
    %p159 = scmp.ne.s32.totalorder %s148, %s151
    %p160 = scmp.eq.s32.totalorder %s41, 11
    %p161 = por %p159, %p160
    %p162 = scmp.ne.s32.totalorder %s151, %s152
    %p163 = scmp.eq.s32.totalorder %s41, 0
    %p164 = por %p162, %p163
    %p165 = scmp.ne.s32.totalorder %s151, %s152
    %p166 = scmp.eq.s32.totalorder %s42, 11
    %p167 = por %p165, %p166
    %p169 = scmp.ne.s32.totalorder %s152, %s168
    %p170 = scmp.eq.s32.totalorder %s42, 0
    %p171 = por %p169, %p170
    %p172 = scmp.le.s32.totalorder 1, %s36
    %p173 = scmp.lt.s32.totalorder %s36, 13
    %p174 = pnand %p172, %p173
    %p175 = pneg %p174
    // Predicated region
    $region9: #{_dropless_moe_mlp_impl.1} parent=5 // pred_check
      _
    $region10: #{_dropless_moe_mlp_impl.1} parent=5 // pred_check_branch
      %177 = sbr.rel (%p174) target = $region12
    $region11: #{_dropless_moe_mlp_impl.1} parent=5 // pred_region
      %s178 = ssub.s32 %s36, 1
    $region12: #{_dropless_moe_mlp_impl.1} parent=5 // pred_fallthru
      _
    %p179 = scmp.lt.s32.totalorder %s36, 12
    // Predicated region
    $region13: #{_dropless_moe_mlp_impl.1} parent=5 // pred_check
      %p180 = pneg %p179
    $region14: #{_dropless_moe_mlp_impl.1} parent=5 // pred_check_branch
      %182 = sbr.rel (%p180) target = $region16
    $region15: #{_dropless_moe_mlp_impl.1} parent=5 // pred_region
      // Predicated region
      $region17: #{_dropless_moe_mlp_impl.1} parent=15 // pred_check
        %p183 = pneg %p70
      $region18: #{_dropless_moe_mlp_impl.1} parent=15 // pred_check_branch
        %185 = sbr.rel (%p183) target = $region20
      $region19: #{_dropless_moe_mlp_impl.1} parent=15 // pred_region
        %s186 = sld [smem:[#allocation3 + %s43]]
        %s187 = smul.u32 16, %s186
        %p188 = scmp.lt.s32.totalorder %s187, 47
        %s189 = scalar_select %p188, %s187, 47
        %s190 = smul.addr %s189, 4
        %s191 = scalar_lea.vmem %s5, %s190
        %s192 = sld [smem:[#allocation3 + %s43]]
        %s193 = smul.u32 16, %s192
      $region20: #{_dropless_moe_mlp_impl.1} parent=15 // pred_fallthru
        _
      // Predicated region
      $region21: #{_dropless_moe_mlp_impl.1} parent=15 // pred_check
        %p194 = pneg %p100
      $region22: #{_dropless_moe_mlp_impl.1} parent=15 // pred_check_branch
        %196 = sbr.rel (%p194) target = $region24
      $region23: #{_dropless_moe_mlp_impl.1} parent=15 // pred_region
        %s197 = sld [smem:[#allocation4 + %s43]]
        %s198 = smul.u32 64, %s44
        %p199 = scmp.lt.s32.totalorder %s197, 3
        %s200 = scalar_select %p199, %s197, 3
        %p201 = scmp.lt.s32.totalorder %s198, 127
        %s202 = scalar_select %p201, %s198, 127
        %s203 = smul.addr %s200, 128
        %s204 = sadd.s32 %s202, %s203
        %s205 = smul.addr %s204, 4
        %s206 = scalar_lea.vmem %s6, %s205
        %s207 = sld [smem:[#allocation4 + %s43]]
        %s208 = smul.u32 64, %s44
      $region24: #{_dropless_moe_mlp_impl.1} parent=15 // pred_fallthru
        _
      // Predicated region
      $region25: #{_dropless_moe_mlp_impl.1} parent=15 // pred_check
        %p209 = pneg %p130
      $region26: #{_dropless_moe_mlp_impl.1} parent=15 // pred_check_branch
        %211 = sbr.rel (%p209) target = $region28
      $region27: #{_dropless_moe_mlp_impl.1} parent=15 // pred_region
        %s212 = sld [smem:[#allocation4 + %s43]]
        %s213 = smul.u32 32, %s44
        %p214 = scmp.lt.s32.totalorder %s212, 3
        %s215 = scalar_select %p214, %s212, 3
        %p216 = scmp.lt.s32.totalorder %s213, 63
        %s217 = scalar_select %p216, %s213, 63
        %s218 = smul.addr %s215, 64
        %s219 = sadd.s32 %s217, %s218
        %s220 = smul.addr %s219, 4
        %s221 = scalar_lea.vmem %s7, %s220
        %s222 = sld [smem:[#allocation4 + %s43]]
        %s223 = smul.u32 32, %s44
      $region28: #{_dropless_moe_mlp_impl.1} parent=15 // pred_fallthru
        _
    $region16: #{_dropless_moe_mlp_impl.1} parent=5 // pred_fallthru
      _
    %p224 = scmp.le.s32.totalorder 1, %s36
    %p225 = scmp.lt.s32.totalorder %s36, 13
    %p226 = pnand %p224, %p225
    %p227 = pneg %p226
    // Predicated region
    $region29: #{_dropless_moe_mlp_impl.1} parent=5 // pred_check
      _
    $region30: #{_dropless_moe_mlp_impl.1} parent=5 // pred_check_branch
      %229 = sbr.rel (%p226) target = $region32
    $region31: #{_dropless_moe_mlp_impl.1} parent=5 // pred_region
      %s230 = ssub.s32 %s36, 1
      %s231 = sld [smem:[#allocation3 + %s45]]
      %s232 = smul.u32 16, %s231
      %p233 = scmp.lt.s32.totalorder %s232, 47
      %s234 = scalar_select %p233, %s232, 47
      %s235 = smul.addr %s234, 4
      %s236 = scalar_lea.vmem %s5, %s235
      %p237 = pneg %p76
      %p238 = pneg %p73
      %s239 = sld [smem:[#allocation4 + %s45]]
      %s240 = smul.u32 64, %s46
      %p241 = scmp.lt.s32.totalorder %s239, 3
      %s242 = scalar_select %p241, %s239, 3
      %p243 = scmp.lt.s32.totalorder %s240, 127
      %s244 = scalar_select %p243, %s240, 127
      %s245 = smul.addr %s242, 128
      %s246 = sadd.s32 %s244, %s245
      %s247 = smul.addr %s246, 4
      %s248 = scalar_lea.vmem %s6, %s247
      %p249 = pneg %p106
      %p250 = pneg %p103
      %s251 = sld [smem:[#allocation4 + %s45]]
      %s252 = smul.u32 32, %s46
      %p253 = scmp.lt.s32.totalorder %s251, 3
      %s254 = scalar_select %p253, %s251, 3
      %p255 = scmp.lt.s32.totalorder %s252, 63
      %s256 = scalar_select %p255, %s252, 63
      %s257 = smul.addr %s254, 64
      %s258 = sadd.s32 %s256, %s257
      %s259 = smul.addr %s258, 4
      %s260 = scalar_lea.vmem %s7, %s259
      %p261 = pneg %p136
      %p262 = pneg %p133
      %p263 = pneg %p164
      %p264 = pneg %p161
      %s265 = sld [smem:[#allocation3 + %s45]]
      %s266 = smul.u32 16, %s265
      %p267 = scmp.lt.s32.totalorder %s266, 47
      %s268 = scalar_select %p267, %s266, 47
      %s269 = smul.addr %s268, 8
      %s270 = scalar_lea.vmem %s8, %s269
      %s271 = sld [smem:[#allocation3 + %s45]]
      %s272 = smul.u32 16, %s271
      %p273 = scmp.lt.s32.totalorder %s272, 47
      %s274 = scalar_select %p273, %s272, 47
      %s275 = smul.addr %s274, 4
      %s276 = scalar_lea.vmem %s5, %s275
      %s277 = sld [smem:[#allocation3 + %s45]]
      %s278 = smul.u32 16, %s277
      %s279 = sld [smem:[#allocation4 + %s45]]
      %s280 = smul.u32 64, %s46
      %p281 = scmp.lt.s32.totalorder %s279, 3
      %s282 = scalar_select %p281, %s279, 3
      %p283 = scmp.lt.s32.totalorder %s280, 127
      %s284 = scalar_select %p283, %s280, 127
      %s285 = smul.addr %s282, 128
      %s286 = sadd.s32 %s284, %s285
      %s287 = smul.addr %s286, 4
      %s288 = scalar_lea.vmem %s6, %s287
      %s289 = sld [smem:[#allocation4 + %s45]]
      %s290 = smul.u32 64, %s46
      %s291 = sld [smem:[#allocation4 + %s45]]
      %s292 = smul.u32 32, %s46
      %p293 = scmp.lt.s32.totalorder %s291, 3
      %s294 = scalar_select %p293, %s291, 3
      %p295 = scmp.lt.s32.totalorder %s292, 63
      %s296 = scalar_select %p295, %s292, 63
      %s297 = smul.addr %s294, 64
      %s298 = sadd.s32 %s296, %s297
      %s299 = smul.addr %s298, 4
      %s300 = scalar_lea.vmem %s7, %s299
      %s301 = sld [smem:[#allocation4 + %s45]]
      %s302 = smul.u32 32, %s46
      %s303 = sld [smem:[#allocation3 + %s45]]
      %s304 = smul.u32 16, %s303
      %p305 = scmp.lt.s32.totalorder %s304, 47
      %s306 = scalar_select %p305, %s304, 47
      %s307 = smul.addr %s306, 8
      %s308 = scalar_lea.vmem %s8, %s307
      %s309 = sld [smem:[#allocation3 + %s45]]
      %s310 = smul.u32 16, %s309
      %p312 = scmp.eq.s32.totalorder %s46, 0
      %s313 = sld [smem:[#allocation7 + %s45]]
      %p314 = scmp.eq.s32.totalorder %s313, 1
      %p315 = pnand %p312, %p314
      %p316 = pneg %p315
      // Predicated region
      $region33: #{_dropless_moe_mlp_impl.1} parent=31 // pred_check
        _
      $region34: #{_dropless_moe_mlp_impl.1} parent=31 // pred_check_branch
        %318 = sbr.rel (%p315) target = $region36
      $region35: #{_dropless_moe_mlp_impl.1} parent=31 // pred_region
        %319 = vst [vmem:[%s308] sm:$0xff] 0.0
        %320 = vst [vmem:[%s308 + $0x8] sm:$0xff] 0.0
        %321 = vst [vmem:[%s308 + $0x10] sm:$0xff] 0.0
        %322 = vst [vmem:[%s308 + $0x18] sm:$0xff] 0.0
        %323 = vst [vmem:[%s308 + $0x20] sm:$0xff] 0.0
        %324 = vst [vmem:[%s308 + $0x28] sm:$0xff] 0.0
        %325 = vst [vmem:[%s308 + $0x30] sm:$0xff] 0.0
        %326 = vst [vmem:[%s308 + $0x38] sm:$0xff] 0.0
        %327 = vst [vmem:[%s308 + $0x40] sm:$0xff] 0.0
        %328 = vst [vmem:[%s308 + $0x48] sm:$0xff] 0.0
        %329 = vst [vmem:[%s308 + $0x50] sm:$0xff] 0.0
        %330 = vst [vmem:[%s308 + $0x58] sm:$0xff] 0.0
        %331 = vst [vmem:[%s308 + $0x60] sm:$0xff] 0.0
        %332 = vst [vmem:[%s308 + $0x68] sm:$0xff] 0.0
        %333 = vst [vmem:[%s308 + $0x70] sm:$0xff] 0.0
        %334 = vst [vmem:[%s308 + $0x78] sm:$0xff] 0.0
      $region36: #{_dropless_moe_mlp_impl.1} parent=31 // pred_fallthru
        _
      %s335 = sld [smem:[#allocation5 + %s45]]
      %s336 = sld [smem:[#allocation6 + %s45]]
      %p337 = scmp.gt.s32.totalorder %s336, %s335
      // Predicated region
      $region37: #{_dropless_moe_mlp_impl.1} parent=31 // pred_check
        %p338 = pneg %p337
      $region38: #{_dropless_moe_mlp_impl.1} parent=31 // pred_check_branch
        %340 = sbr.rel (%p338) target = $region40
      $region39: #{_dropless_moe_mlp_impl.1} parent=31 // pred_region
        %v341 = vld [vmem:[%s276] sm:$0xf]
        %v342 = vld [vmem:[%s276 + $0x4] sm:$0xf]
        %v343 = vld [vmem:[%s276 + $0x8] sm:$0xf]
        %v344 = vld [vmem:[%s276 + $0xc] sm:$0xf]
        %v345 = vld [vmem:[%s276 + $0x10] sm:$0xf]
        %v346 = vld [vmem:[%s276 + $0x14] sm:$0xf]
        %v347 = vld [vmem:[%s276 + $0x18] sm:$0xf]
        %v348 = vld [vmem:[%s276 + $0x1c] sm:$0xf]
        %v349 = vld [vmem:[%s276 + $0x20] sm:$0xf]
        %v350 = vld [vmem:[%s276 + $0x24] sm:$0xf]
        %v351 = vld [vmem:[%s276 + $0x28] sm:$0xf]
        %v352 = vld [vmem:[%s276 + $0x2c] sm:$0xf]
        %v353 = vld [vmem:[%s276 + $0x30] sm:$0xf]
        %v354 = vld [vmem:[%s276 + $0x34] sm:$0xf]
        %v355 = vld [vmem:[%s276 + $0x38] sm:$0xf]
        %v356 = vld [vmem:[%s276 + $0x3c] sm:$0xf]
        %v357 = vld [vmem:[%s288] sm:$0xf]
        %v358 = vld [vmem:[%s288 + $0x4] sm:$0xf]
        %v359 = vld [vmem:[%s288 + $0x8] sm:$0xf]
        %v360 = vld [vmem:[%s288 + $0xc] sm:$0xf]
        %v361 = vld [vmem:[%s288 + $0x10] sm:$0xf]
        %v362 = vld [vmem:[%s288 + $0x14] sm:$0xf]
        %v363 = vld [vmem:[%s288 + $0x18] sm:$0xf]
        %v364 = vld [vmem:[%s288 + $0x1c] sm:$0xf]
        %v365 = vld [vmem:[%s288 + $0x20] sm:$0xf]
        %v366 = vld [vmem:[%s288 + $0x24] sm:$0xf]
        %v367 = vld [vmem:[%s288 + $0x28] sm:$0xf]
        %v368 = vld [vmem:[%s288 + $0x2c] sm:$0xf]
        %v369 = vld [vmem:[%s288 + $0x30] sm:$0xf]
        %v370 = vld [vmem:[%s288 + $0x34] sm:$0xf]
        %v371 = vld [vmem:[%s288 + $0x38] sm:$0xf]
        %v372 = vld [vmem:[%s288 + $0x3c] sm:$0xf]
        %v373 = vld [vmem:[%s288 + $0x40] sm:$0xf]
        %v374 = vld [vmem:[%s288 + $0x44] sm:$0xf]
        %v375 = vld [vmem:[%s288 + $0x48] sm:$0xf]
        %v376 = vld [vmem:[%s288 + $0x4c] sm:$0xf]
        %v377 = vld [vmem:[%s288 + $0x50] sm:$0xf]
        %v378 = vld [vmem:[%s288 + $0x54] sm:$0xf]
        %v379 = vld [vmem:[%s288 + $0x58] sm:$0xf]
        %v380 = vld [vmem:[%s288 + $0x5c] sm:$0xf]
        %v381 = vld [vmem:[%s288 + $0x60] sm:$0xf]
        %v382 = vld [vmem:[%s288 + $0x64] sm:$0xf]
        %v383 = vld [vmem:[%s288 + $0x68] sm:$0xf]
        %v384 = vld [vmem:[%s288 + $0x6c] sm:$0xf]
        %v385 = vld [vmem:[%s288 + $0x70] sm:$0xf]
        %v386 = vld [vmem:[%s288 + $0x74] sm:$0xf]
        %v387 = vld [vmem:[%s288 + $0x78] sm:$0xf]
        %v388 = vld [vmem:[%s288 + $0x7c] sm:$0xf]
        %v389 = vld [vmem:[%s288 + $0x80] sm:$0xf]
        %v390 = vld [vmem:[%s288 + $0x84] sm:$0xf]
        %v391 = vld [vmem:[%s288 + $0x88] sm:$0xf]
        %v392 = vld [vmem:[%s288 + $0x8c] sm:$0xf]
        %v393 = vld [vmem:[%s288 + $0x90] sm:$0xf]
        %v394 = vld [vmem:[%s288 + $0x94] sm:$0xf]
        %v395 = vld [vmem:[%s288 + $0x98] sm:$0xf]
        %v396 = vld [vmem:[%s288 + $0x9c] sm:$0xf]
        %v397 = vld [vmem:[%s288 + $0xa0] sm:$0xf]
        %v398 = vld [vmem:[%s288 + $0xa4] sm:$0xf]
        %v399 = vld [vmem:[%s288 + $0xa8] sm:$0xf]
        %v400 = vld [vmem:[%s288 + $0xac] sm:$0xf]
        %v401 = vld [vmem:[%s288 + $0xb0] sm:$0xf]
        %v402 = vld [vmem:[%s288 + $0xb4] sm:$0xf]
        %v403 = vld [vmem:[%s288 + $0xb8] sm:$0xf]
        %v404 = vld [vmem:[%s288 + $0xbc] sm:$0xf]
        %v405 = vld [vmem:[%s288 + $0xc0] sm:$0xf]
        %v406 = vld [vmem:[%s288 + $0xc4] sm:$0xf]
        %v407 = vld [vmem:[%s288 + $0xc8] sm:$0xf]
        %v408 = vld [vmem:[%s288 + $0xcc] sm:$0xf]
        %v409 = vld [vmem:[%s288 + $0xd0] sm:$0xf]
        %v410 = vld [vmem:[%s288 + $0xd4] sm:$0xf]
        %v411 = vld [vmem:[%s288 + $0xd8] sm:$0xf]
        %v412 = vld [vmem:[%s288 + $0xdc] sm:$0xf]
        %v413 = vld [vmem:[%s288 + $0xe0] sm:$0xf]
        %v414 = vld [vmem:[%s288 + $0xe4] sm:$0xf]
        %v415 = vld [vmem:[%s288 + $0xe8] sm:$0xf]
        %v416 = vld [vmem:[%s288 + $0xec] sm:$0xf]
        %v417 = vld [vmem:[%s288 + $0xf0] sm:$0xf]
        %v418 = vld [vmem:[%s288 + $0xf4] sm:$0xf]
        %v419 = vld [vmem:[%s288 + $0xf8] sm:$0xf]
        %v420 = vld [vmem:[%s288 + $0xfc] sm:$0xf]
        %v421 = vld [vmem:[%s300] sm:$0xf]
        %v422 = vld [vmem:[%s300 + $0x4] sm:$0xf]
        %v423 = vld [vmem:[%s300 + $0x8] sm:$0xf]
        %v424 = vld [vmem:[%s300 + $0xc] sm:$0xf]
        %v425 = vld [vmem:[%s300 + $0x10] sm:$0xf]
        %v426 = vld [vmem:[%s300 + $0x14] sm:$0xf]
        %v427 = vld [vmem:[%s300 + $0x18] sm:$0xf]
        %v428 = vld [vmem:[%s300 + $0x1c] sm:$0xf]
        %v429 = vld [vmem:[%s300 + $0x20] sm:$0xf]
        %v430 = vld [vmem:[%s300 + $0x24] sm:$0xf]
        %v431 = vld [vmem:[%s300 + $0x28] sm:$0xf]
        %v432 = vld [vmem:[%s300 + $0x2c] sm:$0xf]
        %v433 = vld [vmem:[%s300 + $0x30] sm:$0xf]
        %v434 = vld [vmem:[%s300 + $0x34] sm:$0xf]
        %v435 = vld [vmem:[%s300 + $0x38] sm:$0xf]
        %v436 = vld [vmem:[%s300 + $0x3c] sm:$0xf]
        %v437 = vld [vmem:[%s300 + $0x40] sm:$0xf]
        %v438 = vld [vmem:[%s300 + $0x44] sm:$0xf]
        %v439 = vld [vmem:[%s300 + $0x48] sm:$0xf]
        %v440 = vld [vmem:[%s300 + $0x4c] sm:$0xf]
        %v441 = vld [vmem:[%s300 + $0x50] sm:$0xf]
        %v442 = vld [vmem:[%s300 + $0x54] sm:$0xf]
        %v443 = vld [vmem:[%s300 + $0x58] sm:$0xf]
        %v444 = vld [vmem:[%s300 + $0x5c] sm:$0xf]
        %v445 = vld [vmem:[%s300 + $0x60] sm:$0xf]
        %v446 = vld [vmem:[%s300 + $0x64] sm:$0xf]
        %v447 = vld [vmem:[%s300 + $0x68] sm:$0xf]
        %v448 = vld [vmem:[%s300 + $0x6c] sm:$0xf]
        %v449 = vld [vmem:[%s300 + $0x70] sm:$0xf]
        %v450 = vld [vmem:[%s300 + $0x74] sm:$0xf]
        %v451 = vld [vmem:[%s300 + $0x78] sm:$0xf]
        %v452 = vld [vmem:[%s300 + $0x7c] sm:$0xf]
        %v469 = vunpack.c.l.b16 %v341
        %v470 = vunpack.c.l.b16 %v342
        %v471 = vunpack.c.l.b16 %v343
        %v472 = vunpack.c.l.b16 %v344
        %v473 = vunpack.c.l.b16 %v345
        %v474 = vunpack.c.l.b16 %v346
        %v475 = vunpack.c.l.b16 %v347
        %v476 = vunpack.c.l.b16 %v348
        %v477 = vunpack.c.l.b16 %v349
        %v478 = vunpack.c.l.b16 %v350
        %v479 = vunpack.c.l.b16 %v351
        %v480 = vunpack.c.l.b16 %v352
        %v481 = vunpack.c.l.b16 %v353
        %v482 = vunpack.c.l.b16 %v354
        %v483 = vunpack.c.l.b16 %v355
        %v484 = vunpack.c.l.b16 %v356
        %v485 = vpack.c.b16 %v470, %v469
        %v486 = vpack.c.b16 %v472, %v471
        %v487 = vpack.c.b16 %v474, %v473
        %v488 = vpack.c.b16 %v476, %v475
        %v489 = vpack.c.b16 %v478, %v477
        %v490 = vpack.c.b16 %v480, %v479
        %v491 = vpack.c.b16 %v482, %v481
        %v492 = vpack.c.b16 %v484, %v483
        %v565 = vunpack.c.l.b16 %v357
        %v566 = vunpack.c.l.b16 %v358
        %v567 = vunpack.c.l.b16 %v359
        %v568 = vunpack.c.l.b16 %v360
        %v569 = vunpack.c.l.b16 %v361
        %v570 = vunpack.c.l.b16 %v362
        %v571 = vunpack.c.l.b16 %v363
        %v572 = vunpack.c.l.b16 %v364
        %v573 = vunpack.c.l.b16 %v365
        %v574 = vunpack.c.l.b16 %v366
        %v575 = vunpack.c.l.b16 %v367
        %v576 = vunpack.c.l.b16 %v368
        %v577 = vunpack.c.l.b16 %v369
        %v578 = vunpack.c.l.b16 %v370
        %v579 = vunpack.c.l.b16 %v371
        %v580 = vunpack.c.l.b16 %v372
        %v581 = vunpack.c.l.b16 %v373
        %v582 = vunpack.c.l.b16 %v374
        %v583 = vunpack.c.l.b16 %v375
        %v584 = vunpack.c.l.b16 %v376
        %v585 = vunpack.c.l.b16 %v377
        %v586 = vunpack.c.l.b16 %v378
        %v587 = vunpack.c.l.b16 %v379
        %v588 = vunpack.c.l.b16 %v380
        %v589 = vunpack.c.l.b16 %v381
        %v590 = vunpack.c.l.b16 %v382
        %v591 = vunpack.c.l.b16 %v383
        %v592 = vunpack.c.l.b16 %v384
        %v593 = vunpack.c.l.b16 %v385
        %v594 = vunpack.c.l.b16 %v386
        %v595 = vunpack.c.l.b16 %v387
        %v596 = vunpack.c.l.b16 %v388
        %v597 = vunpack.c.l.b16 %v389
        %v598 = vunpack.c.l.b16 %v390
        %v599 = vunpack.c.l.b16 %v391
        %v600 = vunpack.c.l.b16 %v392
        %v601 = vunpack.c.l.b16 %v393
        %v602 = vunpack.c.l.b16 %v394
        %v603 = vunpack.c.l.b16 %v395
        %v604 = vunpack.c.l.b16 %v396
        %v605 = vunpack.c.l.b16 %v397
        %v606 = vunpack.c.l.b16 %v398
        %v607 = vunpack.c.l.b16 %v399
        %v608 = vunpack.c.l.b16 %v400
        %v609 = vunpack.c.l.b16 %v401
        %v610 = vunpack.c.l.b16 %v402
        %v611 = vunpack.c.l.b16 %v403
        %v612 = vunpack.c.l.b16 %v404
        %v613 = vunpack.c.l.b16 %v405
        %v614 = vunpack.c.l.b16 %v406
        %v615 = vunpack.c.l.b16 %v407
        %v616 = vunpack.c.l.b16 %v408
        %v617 = vunpack.c.l.b16 %v409
        %v618 = vunpack.c.l.b16 %v410
        %v619 = vunpack.c.l.b16 %v411
        %v620 = vunpack.c.l.b16 %v412
        %v621 = vunpack.c.l.b16 %v413
        %v622 = vunpack.c.l.b16 %v414
        %v623 = vunpack.c.l.b16 %v415
        %v624 = vunpack.c.l.b16 %v416
        %v625 = vunpack.c.l.b16 %v417
        %v626 = vunpack.c.l.b16 %v418
        %v627 = vunpack.c.l.b16 %v419
        %v628 = vunpack.c.l.b16 %v420
        %v629 = vpack.c.b16 %v566, %v565
        %v630 = vpack.c.b16 %v568, %v567
        %v631 = vpack.c.b16 %v570, %v569
        %v632 = vpack.c.b16 %v572, %v571
        %v633 = vpack.c.b16 %v574, %v573
        %v634 = vpack.c.b16 %v576, %v575
        %v635 = vpack.c.b16 %v578, %v577
        %v636 = vpack.c.b16 %v580, %v579
        %v637 = vpack.c.b16 %v582, %v581
        %v638 = vpack.c.b16 %v584, %v583
        %v639 = vpack.c.b16 %v586, %v585
        %v640 = vpack.c.b16 %v588, %v587
        %v641 = vpack.c.b16 %v590, %v589
        %v642 = vpack.c.b16 %v592, %v591
        %v643 = vpack.c.b16 %v594, %v593
        %v644 = vpack.c.b16 %v596, %v595
        %v645 = vpack.c.b16 %v598, %v597
        %v646 = vpack.c.b16 %v600, %v599
        %v647 = vpack.c.b16 %v602, %v601
        %v648 = vpack.c.b16 %v604, %v603
        %v649 = vpack.c.b16 %v606, %v605
        %v650 = vpack.c.b16 %v608, %v607
        %v651 = vpack.c.b16 %v610, %v609
        %v652 = vpack.c.b16 %v612, %v611
        %v653 = vpack.c.b16 %v614, %v613
        %v654 = vpack.c.b16 %v616, %v615
        %v655 = vpack.c.b16 %v618, %v617
        %v656 = vpack.c.b16 %v620, %v619
        %v657 = vpack.c.b16 %v622, %v621
        %v658 = vpack.c.b16 %v624, %v623
        %v659 = vpack.c.b16 %v626, %v625
        %v660 = vpack.c.b16 %v628, %v627
        %693 = vmatprep.subr.bf16.mxu0 0
        %694 = vmatpush1.bf16.xpose.msra.mxu0 %v636
        %695 = vmatprep.subr.bf16.mxu0 0
        %696 = vmatpush1.bf16.xpose.msra.mxu0 %v635
        %697 = vmatprep.subr.bf16.mxu0 0
        %698 = vmatpush1.bf16.xpose.msra.mxu0 %v634
        %699 = vmatprep.subr.bf16.mxu0 0
        %700 = vmatpush1.bf16.xpose.msra.mxu0 %v633
        %701 = vmatprep.subr.bf16.mxu0 0
        %702 = vmatpush1.bf16.xpose.msra.mxu0 %v632
        %703 = vmatprep.subr.bf16.mxu0 0
        %704 = vmatpush1.bf16.xpose.msra.mxu0 %v631
        %705 = vmatprep.subr.bf16.mxu0 0
        %706 = vmatpush1.bf16.xpose.msra.mxu0 %v630
        %707 = vmatprep.subr.bf16.mxu0 0
        %708 = vmatpush1.bf16.xpose.msra.mxu0 %v629
        %709 = vmatprep.subr.bf16.mxu0 0
        %710 = vmatpush2.bf16.xpose.msra.mxu0 %v644
        %711 = vmatprep.subr.bf16.mxu0 0
        %712 = vmatpush2.bf16.xpose.msra.mxu0 %v643
        %713 = vmatprep.subr.bf16.mxu0 0
        %714 = vmatpush2.bf16.xpose.msra.mxu0 %v642
        %715 = vmatprep.subr.bf16.mxu0 0
        %716 = vmatpush2.bf16.xpose.msra.mxu0 %v641
        %717 = vmatprep.subr.bf16.mxu0 0
        %718 = vmatpush2.bf16.xpose.msra.mxu0 %v640
        %719 = vmatprep.subr.bf16.mxu0 0
        %720 = vmatpush2.bf16.xpose.msra.mxu0 %v639
        %721 = vmatprep.subr.bf16.mxu0 0
        %722 = vmatpush2.bf16.xpose.msra.mxu0 %v638
        %723 = vmatprep.subr.bf16.mxu0 0
        %724 = vmatpush2.bf16.xpose.msra.mxu0 %v637
        %725 = vmatprep.mubr.bf16.mxu0 0
        %726 = vmatmul.mubr.bf16.gmra.mxu0 %v485
        %v727 = vpop.f32.mrf.mxu0
        %v728 = vadd.f32 0.0, %v727
        %v729 = vpop.f32.mrf.mxu0
        %v730 = vadd.f32 0.0, %v729
        %v731 = vpop.f32.mrf.mxu0
        %v732 = vadd.f32 0.0, %v731
        %v733 = vpop.f32.mrf.mxu0
        %v734 = vadd.f32 0.0, %v733
        %735 = vmatprep.mubr.bf16.mxu0 0
        %736 = vmatmul.mubr.bf16.gmra.mxu0 %v486
        %v737 = vpop.f32.mrf.mxu0
        %v738 = vadd.f32 0.0, %v737
        %v739 = vpop.f32.mrf.mxu0
        %v740 = vadd.f32 0.0, %v739
        %v741 = vpop.f32.mrf.mxu0
        %v742 = vadd.f32 0.0, %v741
        %v743 = vpop.f32.mrf.mxu0
        %v744 = vadd.f32 0.0, %v743
        %745 = vmatprep.mubr.bf16.mxu0 0
        %746 = vmatmul.mubr.bf16.gmra.mxu0 %v487
        %v747 = vpop.f32.mrf.mxu0
        %v748 = vadd.f32 0.0, %v747
        %v749 = vpop.f32.mrf.mxu0
        %v750 = vadd.f32 0.0, %v749
        %v751 = vpop.f32.mrf.mxu0
        %v752 = vadd.f32 0.0, %v751
        %v753 = vpop.f32.mrf.mxu0
        %v754 = vadd.f32 0.0, %v753
        %755 = vmatprep.mubr.bf16.mxu0 0
        %756 = vmatmul.mubr.bf16.gmra.mxu0 %v488
        %v757 = vpop.f32.mrf.mxu0
        %v758 = vadd.f32 0.0, %v757
        %v759 = vpop.f32.mrf.mxu0
        %v760 = vadd.f32 0.0, %v759
        %v761 = vpop.f32.mrf.mxu0
        %v762 = vadd.f32 0.0, %v761
        %v763 = vpop.f32.mrf.mxu0
        %v764 = vadd.f32 0.0, %v763
        %765 = vmatprep.mubr.bf16.mxu0 0
        %766 = vmatmul.mubr.bf16.gmra.mxu0 %v489
        %v767 = vpop.f32.mrf.mxu0
        %v768 = vadd.f32 0.0, %v767
        %v769 = vpop.f32.mrf.mxu0
        %v770 = vadd.f32 0.0, %v769
        %v771 = vpop.f32.mrf.mxu0
        %v772 = vadd.f32 0.0, %v771
        %v773 = vpop.f32.mrf.mxu0
        %v774 = vadd.f32 0.0, %v773
        %775 = vmatprep.mubr.bf16.mxu0 0
        %776 = vmatmul.mubr.bf16.gmra.mxu0 %v490
        %v777 = vpop.f32.mrf.mxu0
        %v778 = vadd.f32 0.0, %v777
        %v779 = vpop.f32.mrf.mxu0
        %v780 = vadd.f32 0.0, %v779
        %v781 = vpop.f32.mrf.mxu0
        %v782 = vadd.f32 0.0, %v781
        %v783 = vpop.f32.mrf.mxu0
        %v784 = vadd.f32 0.0, %v783
        %785 = vmatprep.mubr.bf16.mxu0 0
        %786 = vmatmul.mubr.bf16.gmra.mxu0 %v491
        %v787 = vpop.f32.mrf.mxu0
        %v788 = vadd.f32 0.0, %v787
        %v789 = vpop.f32.mrf.mxu0
        %v790 = vadd.f32 0.0, %v789
        %v791 = vpop.f32.mrf.mxu0
        %v792 = vadd.f32 0.0, %v791
        %v793 = vpop.f32.mrf.mxu0
        %v794 = vadd.f32 0.0, %v793
        %795 = vmatprep.mubr.bf16.mxu0 0
        %796 = vmatmul.mubr.bf16.gmra.mxu0 %v492
        %v797 = vpop.f32.mrf.mxu0
        %v798 = vadd.f32 0.0, %v797
        %v799 = vpop.f32.mrf.mxu0
        %v800 = vadd.f32 0.0, %v799
        %v801 = vpop.f32.mrf.mxu0
        %v802 = vadd.f32 0.0, %v801
        %v803 = vpop.f32.mrf.mxu0
        %v804 = vadd.f32 0.0, %v803
        %805 = vdwg.mxu0
        %806 = vmatprep.subr.bf16.mxu0 0
        %807 = vmatpush1.bf16.xpose.msra.mxu0 %v652
        %808 = vmatprep.subr.bf16.mxu0 0
        %809 = vmatpush1.bf16.xpose.msra.mxu0 %v651
        %810 = vmatprep.subr.bf16.mxu0 0
        %811 = vmatpush1.bf16.xpose.msra.mxu0 %v650
        %812 = vmatprep.subr.bf16.mxu0 0
        %813 = vmatpush1.bf16.xpose.msra.mxu0 %v649
        %814 = vmatprep.subr.bf16.mxu0 0
        %815 = vmatpush1.bf16.xpose.msra.mxu0 %v648
        %816 = vmatprep.subr.bf16.mxu0 0
        %817 = vmatpush1.bf16.xpose.msra.mxu0 %v647
        %818 = vmatprep.subr.bf16.mxu0 0
        %819 = vmatpush1.bf16.xpose.msra.mxu0 %v646
        %820 = vmatprep.subr.bf16.mxu0 0
        %821 = vmatpush1.bf16.xpose.msra.mxu0 %v645
        %822 = vmatprep.subr.bf16.mxu0 0
        %823 = vmatpush2.bf16.xpose.msra.mxu0 %v660
        %824 = vmatprep.subr.bf16.mxu0 0
        %825 = vmatpush2.bf16.xpose.msra.mxu0 %v659
        %826 = vmatprep.subr.bf16.mxu0 0
        %827 = vmatpush2.bf16.xpose.msra.mxu0 %v658
        %828 = vmatprep.subr.bf16.mxu0 0
        %829 = vmatpush2.bf16.xpose.msra.mxu0 %v657
        %830 = vmatprep.subr.bf16.mxu0 0
        %831 = vmatpush2.bf16.xpose.msra.mxu0 %v656
        %832 = vmatprep.subr.bf16.mxu0 0
        %833 = vmatpush2.bf16.xpose.msra.mxu0 %v655
        %834 = vmatprep.subr.bf16.mxu0 0
        %835 = vmatpush2.bf16.xpose.msra.mxu0 %v654
        %836 = vmatprep.subr.bf16.mxu0 0
        %837 = vmatpush2.bf16.xpose.msra.mxu0 %v653
        %838 = vmatprep.mubr.bf16.mxu0 0
        %839 = vmatmul.mubr.bf16.gmra.mxu0 %v485
        %v840 = vpop.f32.mrf.mxu0
        %v841 = vadd.f32 0.0, %v840
        %v842 = vpop.f32.mrf.mxu0
        %v843 = vadd.f32 0.0, %v842
        %v844 = vpop.f32.mrf.mxu0
        %v845 = vadd.f32 0.0, %v844
        %v846 = vpop.f32.mrf.mxu0
        %v847 = vadd.f32 0.0, %v846
        %848 = vmatprep.mubr.bf16.mxu0 0
        %849 = vmatmul.mubr.bf16.gmra.mxu0 %v486
        %v850 = vpop.f32.mrf.mxu0
        %v851 = vadd.f32 0.0, %v850
        %v852 = vpop.f32.mrf.mxu0
        %v853 = vadd.f32 0.0, %v852
        %v854 = vpop.f32.mrf.mxu0
        %v855 = vadd.f32 0.0, %v854
        %v856 = vpop.f32.mrf.mxu0
        %v857 = vadd.f32 0.0, %v856
        %858 = vmatprep.mubr.bf16.mxu0 0
        %859 = vmatmul.mubr.bf16.gmra.mxu0 %v487
        %v860 = vpop.f32.mrf.mxu0
        %v861 = vadd.f32 0.0, %v860
        %v862 = vpop.f32.mrf.mxu0
        %v863 = vadd.f32 0.0, %v862
        %v864 = vpop.f32.mrf.mxu0
        %v865 = vadd.f32 0.0, %v864
        %v866 = vpop.f32.mrf.mxu0
        %v867 = vadd.f32 0.0, %v866
        %868 = vmatprep.mubr.bf16.mxu0 0
        %869 = vmatmul.mubr.bf16.gmra.mxu0 %v488
        %v870 = vpop.f32.mrf.mxu0
        %v871 = vadd.f32 0.0, %v870
        %v872 = vpop.f32.mrf.mxu0
        %v873 = vadd.f32 0.0, %v872
        %v874 = vpop.f32.mrf.mxu0
        %v875 = vadd.f32 0.0, %v874
        %v876 = vpop.f32.mrf.mxu0
        %v877 = vadd.f32 0.0, %v876
        %878 = vmatprep.mubr.bf16.mxu0 0
        %879 = vmatmul.mubr.bf16.gmra.mxu0 %v489
        %v880 = vpop.f32.mrf.mxu0
        %v881 = vadd.f32 0.0, %v880
        %v882 = vpop.f32.mrf.mxu0
        %v883 = vadd.f32 0.0, %v882
        %v884 = vpop.f32.mrf.mxu0
        %v885 = vadd.f32 0.0, %v884
        %v886 = vpop.f32.mrf.mxu0
        %v887 = vadd.f32 0.0, %v886
        %888 = vmatprep.mubr.bf16.mxu0 0
        %889 = vmatmul.mubr.bf16.gmra.mxu0 %v490
        %v890 = vpop.f32.mrf.mxu0
        %v891 = vadd.f32 0.0, %v890
        %v892 = vpop.f32.mrf.mxu0
        %v893 = vadd.f32 0.0, %v892
        %v894 = vpop.f32.mrf.mxu0
        %v895 = vadd.f32 0.0, %v894
        %v896 = vpop.f32.mrf.mxu0
        %v897 = vadd.f32 0.0, %v896
        %898 = vmatprep.mubr.bf16.mxu0 0
        %899 = vmatmul.mubr.bf16.gmra.mxu0 %v491
        %v900 = vpop.f32.mrf.mxu0
        %v901 = vadd.f32 0.0, %v900
        %v902 = vpop.f32.mrf.mxu0
        %v903 = vadd.f32 0.0, %v902
        %v904 = vpop.f32.mrf.mxu0
        %v905 = vadd.f32 0.0, %v904
        %v906 = vpop.f32.mrf.mxu0
        %v907 = vadd.f32 0.0, %v906
        %908 = vmatprep.mubr.bf16.mxu0 0
        %909 = vmatmul.mubr.bf16.gmra.mxu0 %v492
        %v910 = vpop.f32.mrf.mxu0
        %v911 = vadd.f32 0.0, %v910
        %v912 = vpop.f32.mrf.mxu0
        %v913 = vadd.f32 0.0, %v912
        %v914 = vpop.f32.mrf.mxu0
        %v915 = vadd.f32 0.0, %v914
        %v916 = vpop.f32.mrf.mxu0
        %v917 = vadd.f32 0.0, %v916
        %918 = vdwg.mxu0
        %v919 = vxor.u32 %v728, 2147483648
        %v920 = vxor.u32 %v730, 2147483648
        %v921 = vxor.u32 %v732, 2147483648
        %v922 = vxor.u32 %v734, 2147483648
        %v923 = vxor.u32 %v738, 2147483648
        %v924 = vxor.u32 %v740, 2147483648
        %v925 = vxor.u32 %v742, 2147483648
        %v926 = vxor.u32 %v744, 2147483648
        %v927 = vxor.u32 %v748, 2147483648
        %v928 = vxor.u32 %v750, 2147483648
        %v929 = vxor.u32 %v752, 2147483648
        %v930 = vxor.u32 %v754, 2147483648
        %v931 = vxor.u32 %v758, 2147483648
        %v932 = vxor.u32 %v760, 2147483648
        %v933 = vxor.u32 %v762, 2147483648
        %v934 = vxor.u32 %v764, 2147483648
        %v935 = vxor.u32 %v768, 2147483648
        %v936 = vxor.u32 %v770, 2147483648
        %v937 = vxor.u32 %v772, 2147483648
        %v938 = vxor.u32 %v774, 2147483648
        %v939 = vxor.u32 %v778, 2147483648
        %v940 = vxor.u32 %v780, 2147483648
        %v941 = vxor.u32 %v782, 2147483648
        %v942 = vxor.u32 %v784, 2147483648
        %v943 = vxor.u32 %v788, 2147483648
        %v944 = vxor.u32 %v790, 2147483648
        %v945 = vxor.u32 %v792, 2147483648
        %v946 = vxor.u32 %v794, 2147483648
        %v947 = vxor.u32 %v798, 2147483648
        %v948 = vxor.u32 %v800, 2147483648
        %v949 = vxor.u32 %v802, 2147483648
        %v950 = vxor.u32 %v804, 2147483648
        %v951 = vmul.f32 %v919, 1.442695
        %v952 = vpow.pop %v951
        %v953 = vmul.f32 %v920, 1.442695
        %v954 = vpow.pop %v953
        %v955 = vmul.f32 %v921, 1.442695
        %v956 = vpow.pop %v955
        %v957 = vmul.f32 %v922, 1.442695
        %v958 = vpow.pop %v957
        %v959 = vmul.f32 %v923, 1.442695
        %v960 = vpow.pop %v959
        %v961 = vmul.f32 %v924, 1.442695
        %v962 = vpow.pop %v961
        %v963 = vmul.f32 %v925, 1.442695
        %v964 = vpow.pop %v963
        %v965 = vmul.f32 %v926, 1.442695
        %v966 = vpow.pop %v965
        %v967 = vmul.f32 %v927, 1.442695
        %v968 = vpow.pop %v967
        %v969 = vmul.f32 %v928, 1.442695
        %v970 = vpow.pop %v969
        %v971 = vmul.f32 %v929, 1.442695
        %v972 = vpow.pop %v971
        %v973 = vmul.f32 %v930, 1.442695
        %v974 = vpow.pop %v973
        %v975 = vmul.f32 %v931, 1.442695
        %v976 = vpow.pop %v975
        %v977 = vmul.f32 %v932, 1.442695
        %v978 = vpow.pop %v977
        %v979 = vmul.f32 %v933, 1.442695
        %v980 = vpow.pop %v979
        %v981 = vmul.f32 %v934, 1.442695
        %v982 = vpow.pop %v981
        %v983 = vmul.f32 %v935, 1.442695
        %v984 = vpow.pop %v983
        %v985 = vmul.f32 %v936, 1.442695
        %v986 = vpow.pop %v985
        %v987 = vmul.f32 %v937, 1.442695
        %v988 = vpow.pop %v987
        %v989 = vmul.f32 %v938, 1.442695
        %v990 = vpow.pop %v989
        %v991 = vmul.f32 %v939, 1.442695
        %v992 = vpow.pop %v991
        %v993 = vmul.f32 %v940, 1.442695
        %v994 = vpow.pop %v993
        %v995 = vmul.f32 %v941, 1.442695
        %v996 = vpow.pop %v995
        %v997 = vmul.f32 %v942, 1.442695
        %v998 = vpow.pop %v997
        %v999 = vmul.f32 %v943, 1.442695
        %v1000 = vpow.pop %v999
        %v1001 = vmul.f32 %v944, 1.442695
        %v1002 = vpow.pop %v1001
        %v1003 = vmul.f32 %v945, 1.442695
        %v1004 = vpow.pop %v1003
        %v1005 = vmul.f32 %v946, 1.442695
        %v1006 = vpow.pop %v1005
        %v1007 = vmul.f32 %v947, 1.442695
        %v1008 = vpow.pop %v1007
        %v1009 = vmul.f32 %v948, 1.442695
        %v1010 = vpow.pop %v1009
        %v1011 = vmul.f32 %v949, 1.442695
        %v1012 = vpow.pop %v1011
        %v1013 = vmul.f32 %v950, 1.442695
        %v1014 = vpow.pop %v1013
        %v1015 = vadd.f32 %v952, 1.0
        %v1016 = vadd.f32 %v954, 1.0
        %v1017 = vadd.f32 %v956, 1.0
        %v1018 = vadd.f32 %v958, 1.0
        %v1019 = vadd.f32 %v960, 1.0
        %v1020 = vadd.f32 %v962, 1.0
        %v1021 = vadd.f32 %v964, 1.0
        %v1022 = vadd.f32 %v966, 1.0
        %v1023 = vadd.f32 %v968, 1.0
        %v1024 = vadd.f32 %v970, 1.0
        %v1025 = vadd.f32 %v972, 1.0
        %v1026 = vadd.f32 %v974, 1.0
        %v1027 = vadd.f32 %v976, 1.0
        %v1028 = vadd.f32 %v978, 1.0
        %v1029 = vadd.f32 %v980, 1.0
        %v1030 = vadd.f32 %v982, 1.0
        %v1031 = vadd.f32 %v984, 1.0
        %v1032 = vadd.f32 %v986, 1.0
        %v1033 = vadd.f32 %v988, 1.0
        %v1034 = vadd.f32 %v990, 1.0
        %v1035 = vadd.f32 %v992, 1.0
        %v1036 = vadd.f32 %v994, 1.0
        %v1037 = vadd.f32 %v996, 1.0
        %v1038 = vadd.f32 %v998, 1.0
        %v1039 = vadd.f32 %v1000, 1.0
        %v1040 = vadd.f32 %v1002, 1.0
        %v1041 = vadd.f32 %v1004, 1.0
        %v1042 = vadd.f32 %v1006, 1.0
        %v1043 = vadd.f32 %v1008, 1.0
        %v1044 = vadd.f32 %v1010, 1.0
        %v1045 = vadd.f32 %v1012, 1.0
        %v1046 = vadd.f32 %v1014, 1.0
        %v1047 = vrcp.pop %v1015
        %v1048 = vmul.f32 1.0, %v1047
        %v1049 = vrcp.pop %v1016
        %v1050 = vmul.f32 1.0, %v1049
        %v1051 = vrcp.pop %v1017
        %v1052 = vmul.f32 1.0, %v1051
        %v1053 = vrcp.pop %v1018
        %v1054 = vmul.f32 1.0, %v1053
        %v1055 = vrcp.pop %v1019
        %v1056 = vmul.f32 1.0, %v1055
        %v1057 = vrcp.pop %v1020
        %v1058 = vmul.f32 1.0, %v1057
        %v1059 = vrcp.pop %v1021
        %v1060 = vmul.f32 1.0, %v1059
        %v1061 = vrcp.pop %v1022
        %v1062 = vmul.f32 1.0, %v1061
        %v1063 = vrcp.pop %v1023
        %v1064 = vmul.f32 1.0, %v1063
        %v1065 = vrcp.pop %v1024
        %v1066 = vmul.f32 1.0, %v1065
        %v1067 = vrcp.pop %v1025
        %v1068 = vmul.f32 1.0, %v1067
        %v1069 = vrcp.pop %v1026
        %v1070 = vmul.f32 1.0, %v1069
        %v1071 = vrcp.pop %v1027
        %v1072 = vmul.f32 1.0, %v1071
        %v1073 = vrcp.pop %v1028
        %v1074 = vmul.f32 1.0, %v1073
        %v1075 = vrcp.pop %v1029
        %v1076 = vmul.f32 1.0, %v1075
        %v1077 = vrcp.pop %v1030
        %v1078 = vmul.f32 1.0, %v1077
        %v1079 = vrcp.pop %v1031
        %v1080 = vmul.f32 1.0, %v1079
        %v1081 = vrcp.pop %v1032
        %v1082 = vmul.f32 1.0, %v1081
        %v1083 = vrcp.pop %v1033
        %v1084 = vmul.f32 1.0, %v1083
        %v1085 = vrcp.pop %v1034
        %v1086 = vmul.f32 1.0, %v1085
        %v1087 = vrcp.pop %v1035
        %v1088 = vmul.f32 1.0, %v1087
        %v1089 = vrcp.pop %v1036
        %v1090 = vmul.f32 1.0, %v1089
        %v1091 = vrcp.pop %v1037
        %v1092 = vmul.f32 1.0, %v1091
        %v1093 = vrcp.pop %v1038
        %v1094 = vmul.f32 1.0, %v1093
        %v1095 = vrcp.pop %v1039
        %v1096 = vmul.f32 1.0, %v1095
        %v1097 = vrcp.pop %v1040
        %v1098 = vmul.f32 1.0, %v1097
        %v1099 = vrcp.pop %v1041
        %v1100 = vmul.f32 1.0, %v1099
        %v1101 = vrcp.pop %v1042
        %v1102 = vmul.f32 1.0, %v1101
        %v1103 = vrcp.pop %v1043
        %v1104 = vmul.f32 1.0, %v1103
        %v1105 = vrcp.pop %v1044
        %v1106 = vmul.f32 1.0, %v1105
        %v1107 = vrcp.pop %v1045
        %v1108 = vmul.f32 1.0, %v1107
        %v1109 = vrcp.pop %v1046
        %v1110 = vmul.f32 1.0, %v1109
        %v1111 = vmul.f32 %v728, %v1048
        %v1112 = vmul.f32 %v730, %v1050
        %v1113 = vmul.f32 %v732, %v1052
        %v1114 = vmul.f32 %v734, %v1054
        %v1115 = vmul.f32 %v738, %v1056
        %v1116 = vmul.f32 %v740, %v1058
        %v1117 = vmul.f32 %v742, %v1060
        %v1118 = vmul.f32 %v744, %v1062
        %v1119 = vmul.f32 %v748, %v1064
        %v1120 = vmul.f32 %v750, %v1066
        %v1121 = vmul.f32 %v752, %v1068
        %v1122 = vmul.f32 %v754, %v1070
        %v1123 = vmul.f32 %v758, %v1072
        %v1124 = vmul.f32 %v760, %v1074
        %v1125 = vmul.f32 %v762, %v1076
        %v1126 = vmul.f32 %v764, %v1078
        %v1127 = vmul.f32 %v768, %v1080
        %v1128 = vmul.f32 %v770, %v1082
        %v1129 = vmul.f32 %v772, %v1084
        %v1130 = vmul.f32 %v774, %v1086
        %v1131 = vmul.f32 %v778, %v1088
        %v1132 = vmul.f32 %v780, %v1090
        %v1133 = vmul.f32 %v782, %v1092
        %v1134 = vmul.f32 %v784, %v1094
        %v1135 = vmul.f32 %v788, %v1096
        %v1136 = vmul.f32 %v790, %v1098
        %v1137 = vmul.f32 %v792, %v1100
        %v1138 = vmul.f32 %v794, %v1102
        %v1139 = vmul.f32 %v798, %v1104
        %v1140 = vmul.f32 %v800, %v1106
        %v1141 = vmul.f32 %v802, %v1108
        %v1142 = vmul.f32 %v804, %v1110
        %v1143 = vmul.f32 %v1111, %v841
        %v1144 = vmul.f32 %v1112, %v843
        %v1145 = vmul.f32 %v1113, %v845
        %v1146 = vmul.f32 %v1114, %v847
        %v1147 = vmul.f32 %v1115, %v851
        %v1148 = vmul.f32 %v1116, %v853
        %v1149 = vmul.f32 %v1117, %v855
        %v1150 = vmul.f32 %v1118, %v857
        %v1151 = vmul.f32 %v1119, %v861
        %v1152 = vmul.f32 %v1120, %v863
        %v1153 = vmul.f32 %v1121, %v865
        %v1154 = vmul.f32 %v1122, %v867
        %v1155 = vmul.f32 %v1123, %v871
        %v1156 = vmul.f32 %v1124, %v873
        %v1157 = vmul.f32 %v1125, %v875
        %v1158 = vmul.f32 %v1126, %v877
        %v1159 = vmul.f32 %v1127, %v881
        %v1160 = vmul.f32 %v1128, %v883
        %v1161 = vmul.f32 %v1129, %v885
        %v1162 = vmul.f32 %v1130, %v887
        %v1163 = vmul.f32 %v1131, %v891
        %v1164 = vmul.f32 %v1132, %v893
        %v1165 = vmul.f32 %v1133, %v895
        %v1166 = vmul.f32 %v1134, %v897
        %v1167 = vmul.f32 %v1135, %v901
        %v1168 = vmul.f32 %v1136, %v903
        %v1169 = vmul.f32 %v1137, %v905
        %v1170 = vmul.f32 %v1138, %v907
        %v1171 = vmul.f32 %v1139, %v911
        %v1172 = vmul.f32 %v1140, %v913
        %v1173 = vmul.f32 %v1141, %v915
        %v1174 = vmul.f32 %v1142, %v917
        %v1175 = vlaneseq
        %v1176 = vshrl.u32 %v1175, 7
        %v1177 = vadd.s32 %v1176, 8
        %v1178 = vadd.s32 %v1176, 16
        %v1179 = vadd.s32 %v1176, 24
        %v1180 = vadd.s32 %v1176, 32
        %v1181 = vadd.s32 %v1176, 40
        %v1182 = vadd.s32 %v1176, 48
        %v1183 = vadd.s32 %v1176, 56
        %v1184 = vadd.s32 %v1176, 64
        %v1185 = vadd.s32 %v1176, 72
        %v1186 = vadd.s32 %v1176, 80
        %v1187 = vadd.s32 %v1176, 88
        %v1188 = vadd.s32 %v1176, 96
        %v1189 = vadd.s32 %v1176, 104
        %v1190 = vadd.s32 %v1176, 112
        %v1191 = vadd.s32 %v1176, 120
        %v1192 = vstv %s335
        %vm1193 = vcmp.ge.s32.totalorder %v1176, %v1192
        %vm1194 = vcmp.ge.s32.totalorder %v1177, %v1192
        %vm1195 = vcmp.ge.s32.totalorder %v1178, %v1192
        %vm1196 = vcmp.ge.s32.totalorder %v1179, %v1192
        %vm1197 = vcmp.ge.s32.totalorder %v1180, %v1192
        %vm1198 = vcmp.ge.s32.totalorder %v1181, %v1192
        %vm1199 = vcmp.ge.s32.totalorder %v1182, %v1192
        %vm1200 = vcmp.ge.s32.totalorder %v1183, %v1192
        %vm1201 = vcmp.ge.s32.totalorder %v1184, %v1192
        %vm1202 = vcmp.ge.s32.totalorder %v1185, %v1192
        %vm1203 = vcmp.ge.s32.totalorder %v1186, %v1192
        %vm1204 = vcmp.ge.s32.totalorder %v1187, %v1192
        %vm1205 = vcmp.ge.s32.totalorder %v1188, %v1192
        %vm1206 = vcmp.ge.s32.totalorder %v1189, %v1192
        %vm1207 = vcmp.ge.s32.totalorder %v1190, %v1192
        %vm1208 = vcmp.ge.s32.totalorder %v1191, %v1192
        %v1209 = vstv %s336
        %vm1210 = vcmp.lt.s32.totalorder %v1176, %v1209
        %vm1211 = vcmp.lt.s32.totalorder %v1177, %v1209
        %vm1212 = vcmp.lt.s32.totalorder %v1178, %v1209
        %vm1213 = vcmp.lt.s32.totalorder %v1179, %v1209
        %vm1214 = vcmp.lt.s32.totalorder %v1180, %v1209
        %vm1215 = vcmp.lt.s32.totalorder %v1181, %v1209
        %vm1216 = vcmp.lt.s32.totalorder %v1182, %v1209
        %vm1217 = vcmp.lt.s32.totalorder %v1183, %v1209
        %vm1218 = vcmp.lt.s32.totalorder %v1184, %v1209
        %vm1219 = vcmp.lt.s32.totalorder %v1185, %v1209
        %vm1220 = vcmp.lt.s32.totalorder %v1186, %v1209
        %vm1221 = vcmp.lt.s32.totalorder %v1187, %v1209
        %vm1222 = vcmp.lt.s32.totalorder %v1188, %v1209
        %vm1223 = vcmp.lt.s32.totalorder %v1189, %v1209
        %vm1224 = vcmp.lt.s32.totalorder %v1190, %v1209
        %vm1225 = vcmp.lt.s32.totalorder %v1191, %v1209
        %vm1226 = vmand %vm1193, %vm1210
        %vm1227 = vmand %vm1194, %vm1211
        %vm1228 = vmand %vm1195, %vm1212
        %vm1229 = vmand %vm1196, %vm1213
        %vm1230 = vmand %vm1197, %vm1214
        %vm1231 = vmand %vm1198, %vm1215
        %vm1232 = vmand %vm1199, %vm1216
        %vm1233 = vmand %vm1200, %vm1217
        %vm1234 = vmand %vm1201, %vm1218
        %vm1235 = vmand %vm1202, %vm1219
        %vm1236 = vmand %vm1203, %vm1220
        %vm1237 = vmand %vm1204, %vm1221
        %vm1238 = vmand %vm1205, %vm1222
        %vm1239 = vmand %vm1206, %vm1223
        %vm1240 = vmand %vm1207, %vm1224
        %vm1241 = vmand %vm1208, %vm1225
        %v1242 = vsel %vm1226, 1, 0
        %v1243 = vsel %vm1227, 1, 0
        %v1244 = vsel %vm1228, 1, 0
        %v1245 = vsel %vm1229, 1, 0
        %v1246 = vsel %vm1230, 1, 0
        %v1247 = vsel %vm1231, 1, 0
        %v1248 = vsel %vm1232, 1, 0
        %v1249 = vsel %vm1233, 1, 0
        %v1250 = vsel %vm1234, 1, 0
        %v1251 = vsel %vm1235, 1, 0
        %v1252 = vsel %vm1236, 1, 0
        %v1253 = vsel %vm1237, 1, 0
        %v1254 = vsel %vm1238, 1, 0
        %v1255 = vsel %vm1239, 1, 0
        %v1256 = vsel %vm1240, 1, 0
        %v1257 = vsel %vm1241, 1, 0
        %vm1258 = vcmp.eq.s32.totalorder %v1242, 1
        %vm1259 = vcmp.eq.s32.totalorder %v1243, 1
        %vm1260 = vcmp.eq.s32.totalorder %v1244, 1
        %vm1261 = vcmp.eq.s32.totalorder %v1245, 1
        %vm1262 = vcmp.eq.s32.totalorder %v1246, 1
        %vm1263 = vcmp.eq.s32.totalorder %v1247, 1
        %vm1264 = vcmp.eq.s32.totalorder %v1248, 1
        %vm1265 = vcmp.eq.s32.totalorder %v1249, 1
        %vm1266 = vcmp.eq.s32.totalorder %v1250, 1
        %vm1267 = vcmp.eq.s32.totalorder %v1251, 1
        %vm1268 = vcmp.eq.s32.totalorder %v1252, 1
        %vm1269 = vcmp.eq.s32.totalorder %v1253, 1
        %vm1270 = vcmp.eq.s32.totalorder %v1254, 1
        %vm1271 = vcmp.eq.s32.totalorder %v1255, 1
        %vm1272 = vcmp.eq.s32.totalorder %v1256, 1
        %vm1273 = vcmp.eq.s32.totalorder %v1257, 1
        %v1274 = vsel %vm1258, %v1143, 0.0
        %v1275 = vsel %vm1258, %v1144, 0.0
        %v1276 = vsel %vm1259, %v1145, 0.0
        %v1277 = vsel %vm1259, %v1146, 0.0
        %v1278 = vsel %vm1260, %v1147, 0.0
        %v1279 = vsel %vm1260, %v1148, 0.0
        %v1280 = vsel %vm1261, %v1149, 0.0
        %v1281 = vsel %vm1261, %v1150, 0.0
        %v1282 = vsel %vm1262, %v1151, 0.0
        %v1283 = vsel %vm1262, %v1152, 0.0
        %v1284 = vsel %vm1263, %v1153, 0.0
        %v1285 = vsel %vm1263, %v1154, 0.0
        %v1286 = vsel %vm1264, %v1155, 0.0
        %v1287 = vsel %vm1264, %v1156, 0.0
        %v1288 = vsel %vm1265, %v1157, 0.0
        %v1289 = vsel %vm1265, %v1158, 0.0
        %v1290 = vsel %vm1266, %v1159, 0.0
        %v1291 = vsel %vm1266, %v1160, 0.0
        %v1292 = vsel %vm1267, %v1161, 0.0
        %v1293 = vsel %vm1267, %v1162, 0.0
        %v1294 = vsel %vm1268, %v1163, 0.0
        %v1295 = vsel %vm1268, %v1164, 0.0
        %v1296 = vsel %vm1269, %v1165, 0.0
        %v1297 = vsel %vm1269, %v1166, 0.0
        %v1298 = vsel %vm1270, %v1167, 0.0
        %v1299 = vsel %vm1270, %v1168, 0.0
        %v1300 = vsel %vm1271, %v1169, 0.0
        %v1301 = vsel %vm1271, %v1170, 0.0
        %v1302 = vsel %vm1272, %v1171, 0.0
        %v1303 = vsel %vm1272, %v1172, 0.0
        %v1304 = vsel %vm1273, %v1173, 0.0
        %v1305 = vsel %vm1273, %v1174, 0.0
        %v1306 = vld [vmem:[%s308] sm:$0xff]
        %v1307 = vld [vmem:[%s308 + $0x8] sm:$0xff]
        %v1308 = vld [vmem:[%s308 + $0x10] sm:$0xff]
        %v1309 = vld [vmem:[%s308 + $0x18] sm:$0xff]
        %v1310 = vld [vmem:[%s308 + $0x20] sm:$0xff]
        %v1311 = vld [vmem:[%s308 + $0x28] sm:$0xff]
        %v1312 = vld [vmem:[%s308 + $0x30] sm:$0xff]
        %v1313 = vld [vmem:[%s308 + $0x38] sm:$0xff]
        %v1314 = vld [vmem:[%s308 + $0x40] sm:$0xff]
        %v1315 = vld [vmem:[%s308 + $0x48] sm:$0xff]
        %v1316 = vld [vmem:[%s308 + $0x50] sm:$0xff]
        %v1317 = vld [vmem:[%s308 + $0x58] sm:$0xff]
        %v1318 = vld [vmem:[%s308 + $0x60] sm:$0xff]
        %v1319 = vld [vmem:[%s308 + $0x68] sm:$0xff]
        %v1320 = vld [vmem:[%s308 + $0x70] sm:$0xff]
        %v1321 = vld [vmem:[%s308 + $0x78] sm:$0xff]
        %v1322 = vpack.c.bf16 %v1276, %v1274
        %v1323 = vpack.c.bf16 %v1277, %v1275
        %v1324 = vpack.c.bf16 %v1280, %v1278
        %v1325 = vpack.c.bf16 %v1281, %v1279
        %v1326 = vpack.c.bf16 %v1284, %v1282
        %v1327 = vpack.c.bf16 %v1285, %v1283
        %v1328 = vpack.c.bf16 %v1288, %v1286
        %v1329 = vpack.c.bf16 %v1289, %v1287
        %v1330 = vpack.c.bf16 %v1292, %v1290
        %v1331 = vpack.c.bf16 %v1293, %v1291
        %v1332 = vpack.c.bf16 %v1296, %v1294
        %v1333 = vpack.c.bf16 %v1297, %v1295
        %v1334 = vpack.c.bf16 %v1300, %v1298
        %v1335 = vpack.c.bf16 %v1301, %v1299
        %v1336 = vpack.c.bf16 %v1304, %v1302
        %v1337 = vpack.c.bf16 %v1305, %v1303
        %v1370 = vunpack.c.l.b16 %v421
        %v1371 = vunpack.c.l.b16 %v422
        %v1372 = vunpack.c.l.b16 %v423
        %v1373 = vunpack.c.l.b16 %v424
        %v1374 = vunpack.c.l.b16 %v425
        %v1375 = vunpack.c.l.b16 %v426
        %v1376 = vunpack.c.l.b16 %v427
        %v1377 = vunpack.c.l.b16 %v428
        %v1378 = vunpack.c.l.b16 %v429
        %v1379 = vunpack.c.l.b16 %v430
        %v1380 = vunpack.c.l.b16 %v431
        %v1381 = vunpack.c.l.b16 %v432
        %v1382 = vunpack.c.l.b16 %v433
        %v1383 = vunpack.c.l.b16 %v434
        %v1384 = vunpack.c.l.b16 %v435
        %v1385 = vunpack.c.l.b16 %v436
        %v1386 = vunpack.c.l.b16 %v437
        %v1387 = vunpack.c.l.b16 %v438
        %v1388 = vunpack.c.l.b16 %v439
        %v1389 = vunpack.c.l.b16 %v440
        %v1390 = vunpack.c.l.b16 %v441
        %v1391 = vunpack.c.l.b16 %v442
        %v1392 = vunpack.c.l.b16 %v443
        %v1393 = vunpack.c.l.b16 %v444
        %v1394 = vunpack.c.l.b16 %v445
        %v1395 = vunpack.c.l.b16 %v446
        %v1396 = vunpack.c.l.b16 %v447
        %v1397 = vunpack.c.l.b16 %v448
        %v1398 = vunpack.c.l.b16 %v449
        %v1399 = vunpack.c.l.b16 %v450
        %v1400 = vunpack.c.l.b16 %v451
        %v1401 = vunpack.c.l.b16 %v452
        %v1402 = vpack.c.b16 %v1371, %v1370
        %v1403 = vpack.c.b16 %v1373, %v1372
        %v1404 = vpack.c.b16 %v1375, %v1374
        %v1405 = vpack.c.b16 %v1377, %v1376
        %v1406 = vpack.c.b16 %v1379, %v1378
        %v1407 = vpack.c.b16 %v1381, %v1380
        %v1408 = vpack.c.b16 %v1383, %v1382
        %v1409 = vpack.c.b16 %v1385, %v1384
        %v1410 = vpack.c.b16 %v1387, %v1386
        %v1411 = vpack.c.b16 %v1389, %v1388
        %v1412 = vpack.c.b16 %v1391, %v1390
        %v1413 = vpack.c.b16 %v1393, %v1392
        %v1414 = vpack.c.b16 %v1395, %v1394
        %v1415 = vpack.c.b16 %v1397, %v1396
        %v1416 = vpack.c.b16 %v1399, %v1398
        %v1417 = vpack.c.b16 %v1401, %v1400
        %1434 = vmatprep.subr.bf16.mxu0 0
        %1435 = vmatpush1.bf16.msra.mxu0 %v1409
        %1436 = vmatprep.subr.bf16.mxu0 0
        %1437 = vmatpush1.bf16.msra.mxu0 %v1408
        %1438 = vmatprep.subr.bf16.mxu0 0
        %1439 = vmatpush1.bf16.msra.mxu0 %v1407
        %1440 = vmatprep.subr.bf16.mxu0 0
        %1441 = vmatpush1.bf16.msra.mxu0 %v1406
        %1442 = vmatprep.subr.bf16.mxu0 0
        %1443 = vmatpush1.bf16.msra.mxu0 %v1405
        %1444 = vmatprep.subr.bf16.mxu0 0
        %1445 = vmatpush1.bf16.msra.mxu0 %v1404
        %1446 = vmatprep.subr.bf16.mxu0 0
        %1447 = vmatpush1.bf16.msra.mxu0 %v1403
        %1448 = vmatprep.subr.bf16.mxu0 0
        %1449 = vmatpush1.bf16.msra.mxu0 %v1402
        %1450 = vmatprep.subr.bf16.mxu0 0
        %1451 = vmatpush2.bf16.msra.mxu0 %v1417
        %1452 = vmatprep.subr.bf16.mxu0 0
        %1453 = vmatpush2.bf16.msra.mxu0 %v1416
        %1454 = vmatprep.subr.bf16.mxu0 0
        %1455 = vmatpush2.bf16.msra.mxu0 %v1415
        %1456 = vmatprep.subr.bf16.mxu0 0
        %1457 = vmatpush2.bf16.msra.mxu0 %v1414
        %1458 = vmatprep.subr.bf16.mxu0 0
        %1459 = vmatpush2.bf16.msra.mxu0 %v1413
        %1460 = vmatprep.subr.bf16.mxu0 0
        %1461 = vmatpush2.bf16.msra.mxu0 %v1412
        %1462 = vmatprep.subr.bf16.mxu0 0
        %1463 = vmatpush2.bf16.msra.mxu0 %v1411
        %1464 = vmatprep.subr.bf16.mxu0 0
        %1465 = vmatpush2.bf16.msra.mxu0 %v1410
        %1466 = vmatprep.mubr.bf16.mxu0 %v1323
        %1467 = vmatmul.mubr.bf16.gmra.mxu0 %v1322
        %v1468 = vpop.f32.mrf.mxu0
        %v1469 = vadd.f32 0.0, %v1468
        %v1470 = vpop.f32.mrf.mxu0
        %v1471 = vpop.f32.mrf.mxu0
        %v1472 = vadd.f32 0.0, %v1471
        %v1473 = vpop.f32.mrf.mxu0
        %1474 = vmatprep.mubr.bf16.mxu0 %v1325
        %1475 = vmatmul.mubr.bf16.gmra.mxu0 %v1324
        %v1476 = vpop.f32.mrf.mxu0
        %v1477 = vadd.f32 0.0, %v1476
        %v1478 = vpop.f32.mrf.mxu0
        %v1479 = vpop.f32.mrf.mxu0
        %v1480 = vadd.f32 0.0, %v1479
        %v1481 = vpop.f32.mrf.mxu0
        %1482 = vmatprep.mubr.bf16.mxu0 %v1327
        %1483 = vmatmul.mubr.bf16.gmra.mxu0 %v1326
        %v1484 = vpop.f32.mrf.mxu0
        %v1485 = vadd.f32 0.0, %v1484
        %v1486 = vpop.f32.mrf.mxu0
        %v1487 = vpop.f32.mrf.mxu0
        %v1488 = vadd.f32 0.0, %v1487
        %v1489 = vpop.f32.mrf.mxu0
        %1490 = vmatprep.mubr.bf16.mxu0 %v1329
        %1491 = vmatmul.mubr.bf16.gmra.mxu0 %v1328
        %v1492 = vpop.f32.mrf.mxu0
        %v1493 = vadd.f32 0.0, %v1492
        %v1494 = vpop.f32.mrf.mxu0
        %v1495 = vpop.f32.mrf.mxu0
        %v1496 = vadd.f32 0.0, %v1495
        %v1497 = vpop.f32.mrf.mxu0
        %1498 = vmatprep.mubr.bf16.mxu0 %v1331
        %1499 = vmatmul.mubr.bf16.gmra.mxu0 %v1330
        %v1500 = vpop.f32.mrf.mxu0
        %v1501 = vadd.f32 0.0, %v1500
        %v1502 = vpop.f32.mrf.mxu0
        %v1503 = vpop.f32.mrf.mxu0
        %v1504 = vadd.f32 0.0, %v1503
        %v1505 = vpop.f32.mrf.mxu0
        %1506 = vmatprep.mubr.bf16.mxu0 %v1333
        %1507 = vmatmul.mubr.bf16.gmra.mxu0 %v1332
        %v1508 = vpop.f32.mrf.mxu0
        %v1509 = vadd.f32 0.0, %v1508
        %v1510 = vpop.f32.mrf.mxu0
        %v1511 = vpop.f32.mrf.mxu0
        %v1512 = vadd.f32 0.0, %v1511
        %v1513 = vpop.f32.mrf.mxu0
        %1514 = vmatprep.mubr.bf16.mxu0 %v1335
        %1515 = vmatmul.mubr.bf16.gmra.mxu0 %v1334
        %v1516 = vpop.f32.mrf.mxu0
        %v1517 = vadd.f32 0.0, %v1516
        %v1518 = vpop.f32.mrf.mxu0
        %v1519 = vpop.f32.mrf.mxu0
        %v1520 = vadd.f32 0.0, %v1519
        %v1521 = vpop.f32.mrf.mxu0
        %1522 = vmatprep.mubr.bf16.mxu0 %v1337
        %1523 = vmatmul.mubr.bf16.gmra.mxu0 %v1336
        %v1524 = vpop.f32.mrf.mxu0
        %v1525 = vadd.f32 0.0, %v1524
        %v1526 = vpop.f32.mrf.mxu0
        %v1527 = vpop.f32.mrf.mxu0
        %v1528 = vadd.f32 0.0, %v1527
        %v1529 = vpop.f32.mrf.mxu0
        %1530 = vdwg.mxu0
        %v1531 = vadd.f32 %v1306, %v1469
        %v1532 = vadd.f32 %v1307, %v1472
        %v1533 = vadd.f32 %v1308, %v1477
        %v1534 = vadd.f32 %v1309, %v1480
        %v1535 = vadd.f32 %v1310, %v1485
        %v1536 = vadd.f32 %v1311, %v1488
        %v1537 = vadd.f32 %v1312, %v1493
        %v1538 = vadd.f32 %v1313, %v1496
        %v1539 = vadd.f32 %v1314, %v1501
        %v1540 = vadd.f32 %v1315, %v1504
        %v1541 = vadd.f32 %v1316, %v1509
        %v1542 = vadd.f32 %v1317, %v1512
        %v1543 = vadd.f32 %v1318, %v1517
        %v1544 = vadd.f32 %v1319, %v1520
        %v1545 = vadd.f32 %v1320, %v1525
        %v1546 = vadd.f32 %v1321, %v1528
        %1547 = vst [vmem:[%s308] sm:$0xff] %v1531
        %1548 = vst [vmem:[%s308 + $0x8] sm:$0xff] %v1532
        %1549 = vst [vmem:[%s308 + $0x10] sm:$0xff] %v1533
        %1550 = vst [vmem:[%s308 + $0x18] sm:$0xff] %v1534
        %1551 = vst [vmem:[%s308 + $0x20] sm:$0xff] %v1535
        %1552 = vst [vmem:[%s308 + $0x28] sm:$0xff] %v1536
        %1553 = vst [vmem:[%s308 + $0x30] sm:$0xff] %v1537
        %1554 = vst [vmem:[%s308 + $0x38] sm:$0xff] %v1538
        %1555 = vst [vmem:[%s308 + $0x40] sm:$0xff] %v1539
        %1556 = vst [vmem:[%s308 + $0x48] sm:$0xff] %v1540
        %1557 = vst [vmem:[%s308 + $0x50] sm:$0xff] %v1541
        %1558 = vst [vmem:[%s308 + $0x58] sm:$0xff] %v1542
        %1559 = vst [vmem:[%s308 + $0x60] sm:$0xff] %v1543
        %1560 = vst [vmem:[%s308 + $0x68] sm:$0xff] %v1544
        %1561 = vst [vmem:[%s308 + $0x70] sm:$0xff] %v1545
        %1562 = vst [vmem:[%s308 + $0x78] sm:$0xff] %v1546
      $region40: #{_dropless_moe_mlp_impl.1} parent=31 // pred_fallthru
        _
      %s1563 = sld [smem:[#allocation3 + %s45]]
      %s1564 = smul.u32 16, %s1563
      %p1565 = scmp.lt.s32.totalorder %s1564, 47
      %s1566 = scalar_select %p1565, %s1564, 47
      %s1567 = smul.addr %s1566, 8
      %s1568 = scalar_lea.vmem %s8, %s1567
      // Predicated region
      $region41: #{_dropless_moe_mlp_impl.1} parent=31 // pred_check
        %p1569 = pneg %p161
      $region42: #{_dropless_moe_mlp_impl.1} parent=31 // pred_check_branch
        %1571 = sbr.rel (%p1569) target = $region44
      $region43: #{_dropless_moe_mlp_impl.1} parent=31 // pred_region
        %s1572 = sld [smem:[#allocation3 + %s45]]
        %s1573 = smul.u32 16, %s1572
      $region44: #{_dropless_moe_mlp_impl.1} parent=31 // pred_fallthru
        _
    $region32: #{_dropless_moe_mlp_impl.1} parent=5 // pred_fallthru
      _
    %p1574 = scmp.le.s32.totalorder 2, %s36
    // Predicated region
    $region45: #{_dropless_moe_mlp_impl.1} parent=5 // pred_check
      %p1575 = pneg %p1574
    $region46: #{_dropless_moe_mlp_impl.1} parent=5 // pred_check_branch
      %1577 = sbr.rel (%p1575) target = $region48
    $region47: #{_dropless_moe_mlp_impl.1} parent=5 // pred_region
      %s1578 = ssub.s32 %s36, 2
      // Predicated region
      $region49: #{_dropless_moe_mlp_impl.1} parent=47 // pred_check
        %p1579 = pneg %p167
      $region50: #{_dropless_moe_mlp_impl.1} parent=47 // pred_check_branch
        %1581 = sbr.rel (%p1579) target = $region52
      $region51: #{_dropless_moe_mlp_impl.1} parent=47 // pred_region
        %s1582 = sld [smem:[#allocation3 + %s47]]
        %s1583 = smul.u32 16, %s1582
        %p1584 = scmp.lt.s32.totalorder %s1583, 47
        %s1585 = scalar_select %p1584, %s1583, 47
        %s1586 = smul.addr %s1585, 8
        %s1587 = scalar_lea.vmem %s8, %s1586
      $region52: #{_dropless_moe_mlp_impl.1} parent=47 // pred_fallthru
        _
    $region48: #{_dropless_moe_mlp_impl.1} parent=5 // pred_fallthru
      _
  $region6: #{_dropless_moe_mlp_impl.1} parent=0 // loop_footer
    %s40 = sadd.s32 1, %s36
  $region7: #{_dropless_moe_mlp_impl.1} parent=0 // loop_footer_branch
    %35 = sbr.rel target = $region3
  $region8: #{_dropless_moe_mlp_impl.1} parent=0 // loop_exit
    _

</llo_original>
